<compile_context>
chip_gen: v5e
topology: v5e:2x2
jax: 0.10.0
libtpu: 0.0.40
codegen_flags: <defaults>
</compile_context>

<pallas_src>
import functools

import jax
import jax.numpy as jnp
from jax import lax
from jax.experimental import pallas as pl
from jax.experimental.pallas import tpu as pltpu


def _round_up(x, m):
    return ((x + m - 1) // m) * m


_CH_ALIGN = 16      # bf16 packs 16 rows per 32-bit sublane pair
_LANE = 128


# --------------------------------------------------------------------------
# Fused DoubleConv kernel: (conv3x3 + folded-BN + ReLU) x 2, all in VMEM
# --------------------------------------------------------------------------
def _double_conv_kernel(x_ref, w1_ref, sh1_ref, w2_ref, sh2_ref, mask_ref,
                        o_ref, scr_ref, h_ref, *,
                        offsets, cin_p, cmid_p, l_x, l_o):
    """
    x_ref:   (Cin_p,  L_in)      bf16  flattened halo-padded input (front-shifted)
    w1_ref:  (Cmid_p, 9*Cin_p)   bf16  tap-stacked conv1 weights (BN1 scale folded)
    sh1_ref: (Cmid_p, 1)         f32   BN1 shift
    w2_ref:  (Cout_p, 9*Cmid_p)  bf16  tap-stacked conv2 weights (BN2 scale folded)
    sh2_ref: (Cout_p, 1)         f32   BN2 shift
    mask_ref:(1, L_x)            f32   1 on interior pixels of the padded layout
    o_ref:   (Cout_p, L_o)       f32   flattened conv2 output (lane-dense)
    scr_ref: (9*max(Cin_p,Cmid_p), L_x) bf16   shared im2col scratch
    h_ref:   (Cmid_p, L_x)       bf16  conv1 output already in conv2's padded layout
    """
    k1 = 9 * cin_p
    k2 = 9 * cmid_p

    # ---- conv1: build im2col once (9 static lane-shift copies), one wide-K matmul
    for t, off in enumerate(offsets):
        scr_ref[t * cin_p:(t + 1) * cin_p, :] = x_ref[:, off:off + l_x]
    acc1 = jnp.dot(w1_ref[...], scr_ref[:k1, :],
                   preferred_element_type=jnp.float32)
    # folded BN shift + ReLU, then zero the halo ring / garbage columns so the
    # intermediate is a valid zero-padded image for conv2.
    h = jnp.maximum(acc1 + sh1_ref[...], 0.0) * mask_ref[...]
    h_ref[...] = h.astype(h_ref.dtype)

    # ---- conv2: consume the intermediate straight from VMEM
    for t, off in enumerate(offsets):
        scr_ref[t * cmid_p:(t + 1) * cmid_p, :l_o] = h_ref[:, off:off + l_o]
    acc2 = jnp.dot(w2_ref[...], scr_ref[:k2, :l_o],
                   preferred_element_type=jnp.float32)
    o_ref[...] = jnp.maximum(acc2 + sh2_ref[...], 0.0).astype(o_ref.dtype)


def double_conv_fused(x, w1, scale1, shift1, w2, scale2, shift2):
    """DoubleConv (inference BN folded to scale/shift) on NCHW input."""
    N, c_in, H, W = x.shape
    c_mid = w1.shape[0]
    c_out = w2.shape[0]

    cin_p = _round_up(c_in, _CH_ALIGN)
    cmid_p = _round_up(c_mid, _CH_ALIGN)
    cout_p = _round_up(c_out, _CH_ALIGN)

    hp, wp = H + 2, W + 2
    pad0 = wp + 1                 # front shift: conv1 writes in conv2's padded layout
    span = 2 * wp + 2             # largest tap offset (dy=2, dx=2)

    l_base = N * hp * wp          # batch folded into the (row-major) lane axis
    l_o = _round_up(l_base, _LANE)          # conv2 output lanes
    l_x = _round_up(l_o + span, _LANE)      # intermediate / im2col lanes
    l_in = _round_up(l_x + span, _LANE)     # conv1 input lanes

    # ---- input: halo pad, channel pad, fold batch into lanes, bf16 cast ----
    xp = jnp.pad(x, ((0, 0), (0, cin_p - c_in), (1, 1), (1, 1)))
    x_flat = jnp.transpose(xp, (1, 0, 2, 3)).reshape(cin_p, l_base)
    x_flat = jnp.pad(x_flat, ((0, 0), (pad0, l_in - pad0 - l_base)))
    x_flat = x_flat.astype(jnp.bfloat16)

    # ---- weights: fold BN scale, pad channels, stack the 9 taps into K ----
    def stack_w(w, scale, ci_p, co_p):
        wf = w * scale[:, None, None, None]
        wf = jnp.pad(wf, ((0, co_p - w.shape[0]), (0, ci_p - w.shape[1]),
                          (0, 0), (0, 0)))
        # (Co_p, Ci_p, 3, 3) -> (Co_p, 3, 3, Ci_p) -> (Co_p, 9*Ci_p)
        return jnp.transpose(wf, (0, 2, 3, 1)).reshape(
            co_p, 9 * ci_p).astype(jnp.bfloat16)

    w1s = stack_w(w1, scale1, cin_p, cmid_p)
    w2s = stack_w(w2, scale2, cmid_p, cout_p)
    sh1 = jnp.pad(shift1, (0, cmid_p - c_mid)).reshape(cmid_p, 1).astype(jnp.float32)
    sh2 = jnp.pad(shift2, (0, cout_p - c_out)).reshape(cout_p, 1).astype(jnp.float32)

    # interior mask of the padded layout (zeroes halo ring + padding lanes)
    m2d = jnp.zeros((hp, wp), jnp.float32).at[1:H + 1, 1:W + 1].set(1.0)
    mask = jnp.tile(m2d.reshape(-1), (N,))
    mask = jnp.pad(mask, (0, l_x - l_base)).reshape(1, l_x)

    offsets = tuple(dy * wp + dx for dy in range(3) for dx in range(3))
    kmax = 9 * max(cin_p, cmid_p)

    kernel = functools.partial(
        _double_conv_kernel, offsets=offsets, cin_p=cin_p, cmid_p=cmid_p,
        l_x=l_x, l_o=l_o)

    flops = 2 * (cmid_p * 9 * cin_p * l_x + cout_p * 9 * cmid_p * l_o)
    bytes_accessed = (2 * cin_p * l_in + 4 * cout_p * l_o
                      + 2 * (cmid_p * 9 * cin_p + cout_p * 9 * cmid_p)
                      + 4 * (l_x + cmid_p + cout_p))

    out_flat = pl.pallas_call(
        kernel,
        out_shape=jax.ShapeDtypeStruct((cout_p, l_o), jnp.float32),
        grid_spec=pltpu.PrefetchScalarGridSpec(
            num_scalar_prefetch=0,
            grid=(1,),
            in_specs=[
                pl.BlockSpec((cin_p, l_in), lambda i: (0, 0)),
                pl.BlockSpec((cmid_p, 9 * cin_p), lambda i: (0, 0)),
                pl.BlockSpec((cmid_p, 1), lambda i: (0, 0)),
                pl.BlockSpec((cout_p, 9 * cmid_p), lambda i: (0, 0)),
                pl.BlockSpec((cout_p, 1), lambda i: (0, 0)),
                pl.BlockSpec((1, l_x), lambda i: (0, 0)),
            ],
            out_specs=pl.BlockSpec((cout_p, l_o), lambda i: (0, 0)),
            scratch_shapes=[
                pltpu.VMEM((kmax, l_x), jnp.bfloat16),   # shared im2col
                pltpu.VMEM((cmid_p, l_x), jnp.bfloat16), # conv1 output (padded layout)
            ]),
        compiler_params=pltpu.CompilerParams(
            dimension_semantics=("arbitrary",)),
        cost_estimate=pl.CostEstimate(
            flops=flops, transcendentals=0, bytes_accessed=bytes_accessed),
    )(x_flat, w1s, sh1, w2s, sh2, mask)

    # strip channel padding, lane padding, halo rows/columns
    out = out_flat[:c_out, :l_base].reshape(c_out, N, hp, wp)[:, :, :H, :W]
    return jnp.transpose(out, (1, 0, 2, 3))


# --------------------------------------------------------------------------
# Wrapper glue: bilinear 2x upsample (align_corners=True), pad, concat
# --------------------------------------------------------------------------
def _interp_matrix_align_corners(n_in, n_out, dtype=jnp.float32):
    """(n_out, n_in) linear-interpolation matrix, align_corners=True."""
    if n_in == 1:
        return jnp.ones((n_out, 1), dtype)
    src = jnp.arange(n_out, dtype=jnp.float32) * (n_in - 1) / (n_out - 1)
    i0 = jnp.clip(jnp.floor(src).astype(jnp.int32), 0, n_in - 2)
    frac = src - i0.astype(jnp.float32)
    rows = jnp.arange(n_out)
    a = jnp.zeros((n_out, n_in), dtype)
    a = a.at[rows, i0].add(1.0 - frac)
    a = a.at[rows, i0 + 1].add(frac)
    return a


def _bilinear_upsample_2x(x):
    """nn.Upsample(scale_factor=2, mode='bilinear', align_corners=True)."""
    _, _, h, w = x.shape
    a_h = _interp_matrix_align_corners(h, 2 * h)
    a_w = _interp_matrix_align_corners(w, 2 * w)
    return jnp.einsum('Hh,nchw,Ww->ncHW', a_h, x, a_w)


def _prep_inputs(x1, x2):
    x1u = _bilinear_upsample_2x(x1)
    diff_y = x2.shape[2] - x1u.shape[2]
    diff_x = x2.shape[3] - x1u.shape[3]
    x1u = jnp.pad(x1u, ((0, 0), (0, 0),
                        (diff_y // 2, diff_y - diff_y // 2),
                        (diff_x // 2, diff_x - diff_x // 2)))
    return jnp.concatenate([x2, x1u], axis=1)


def up_forward(x1, x2, params):
    """Forward of Up(bilinear=True): upsample -> pad -> concat -> DoubleConv."""
    x = _prep_inputs(x1, x2)
    return double_conv_fused(x, params['w1'], params['scale1'], params['shift1'],
                             params['w2'], params['scale2'], params['shift2'])


# --------------------------------------------------------------------------
# Pure-JAX reference for verification
# --------------------------------------------------------------------------
def _conv_bn_relu_ref(x, w, scale, shift, *, bf16_operands):
    wf = w * scale[:, None, None, None]
    if bf16_operands:                    # mirror the kernel's bf16 operand cast
        x = x.astype(jnp.bfloat16).astype(jnp.float32)
        wf = wf.astype(jnp.bfloat16).astype(jnp.float32)
    y = lax.conv_general_dilated(
        x, wf, window_strides=(1, 1), padding='SAME',
        dimension_numbers=('NCHW', 'OIHW', 'NCHW'),
        precision=lax.Precision.HIGHEST)
    y = y + shift[None, :, None, None]
    return jnp.maximum(y, 0.0)


def up_forward_ref(x1, x2, params, *, bf16_operands=False):
    x = _prep_inputs(x1, x2)
    h = _conv_bn_relu_ref(x, params['w1'], params['scale1'], params['shift1'],
                          bf16_operands=bf16_operands)
    return _conv_bn_relu_ref(h, params['w2'], params['scale2'], params['shift2'],
                             bf16_operands=bf16_operands)


if __name__ == "__main__":
    key = jax.random.PRNGKey(0)
    keys = jax.random.split(key, 12)

    # Up(in_channels=8, out_channels=4, bilinear=True):
    #   x1 (deep feature): in_channels//2 = 4 ch at half resolution,
    #   x2 (skip):         in_channels//2 = 4 ch at full resolution,
    #   concat -> 8 ch, DoubleConv mid = in_channels//2 = 4, out = 4.
    N = 2
    c_in_total, c_mid, c_out = 8, 4, 4
    x1 = jax.random.normal(keys[0], (N, c_in_total // 2, 8, 8), jnp.float32)
    x2 = jax.random.normal(keys[1], (N, c_in_total // 2, 16, 16), jnp.float32)

    w1 = jax.random.normal(keys[2], (c_mid, c_in_total, 3, 3), jnp.float32) * 0.2
    w2 = jax.random.normal(keys[3], (c_out, c_mid, 3, 3), jnp.float32) * 0.2

    eps = 1e-5

    def folded_bn(kg, kb, km, kv, c):
        gamma = 1.0 + 0.1 * jax.random.normal(kg, (c,), jnp.float32)
        beta = 0.1 * jax.random.normal(kb, (c,), jnp.float32)
        mean = 0.1 * jax.random.normal(km, (c,), jnp.float32)
        var = jax.random.uniform(kv, (c,), jnp.float32, minval=0.5, maxval=1.5)
        scale = gamma / jnp.sqrt(var + eps)
        shift = beta - mean * scale
        return scale, shift

    scale1, shift1 = folded_bn(keys[4], keys[5], keys[6], keys[7], c_mid)
    scale2, shift2 = folded_bn(keys[8], keys[9], keys[10], keys[11], c_out)

    params = dict(w1=w1, scale1=scale1, shift1=shift1,
                  w2=w2, scale2=scale2, shift2=shift2)

    out = up_forward(x1, x2, params)
    jax.block_until_ready(out)

    # Reference with the same bf16 operand quantization (f32 accumulation), so
    # the check validates the kernel's math tightly despite the bf16 cast.
    ref = up_forward_ref(x1, x2, params, bf16_operands=True)
    assert out.shape == (N, c_out, 16, 16), out.shape
    max_err = float(jnp.max(jnp.abs(out - ref)))
    assert jnp.allclose(out, ref, atol=2e-3, rtol=2e-3), max_err

    print("KERNEL_OK")
</pallas_src>

<mosaic_0001>
module attributes {stable_mosaic.version = 11 : i64} {
  func.func @_double_conv_kernel(%arg0: i32, %arg1: memref<16x1024xbf16, #tpu.memory_space<vmem>>, %arg2: memref<16x144xbf16, #tpu.memory_space<vmem>>, %arg3: memref<16x1xf32, #tpu.memory_space<vmem>>, %arg4: memref<16x144xbf16, #tpu.memory_space<vmem>>, %arg5: memref<16x1xf32, #tpu.memory_space<vmem>>, %arg6: memref<1x896xf32, #tpu.memory_space<vmem>>, %arg7: memref<16x768xf32, #tpu.memory_space<vmem>>, %arg8: memref<144x896xbf16, #tpu.memory_space<vmem>>, %arg9: memref<16x896xbf16, #tpu.memory_space<vmem>>) attributes {dimension_semantics = [#tpu.dimension_semantics<arbitrary>], iteration_bounds = array<i64: 1>, scalar_prefetch = 0 : i64, scratch_operands = 2 : i64, tpu.core_type = #tpu.core_type<tc>, window_params = [{pipeline_mode = #tpu.pipeline_mode<synchronous>, transform_indices = @transform_0, window_bounds = array<i64: 16, 1024>}, {pipeline_mode = #tpu.pipeline_mode<synchronous>, transform_indices = @transform_1, window_bounds = array<i64: 16, 144>}, {pipeline_mode = #tpu.pipeline_mode<synchronous>, transform_indices = @transform_2, window_bounds = array<i64: 16, 1>}, {pipeline_mode = #tpu.pipeline_mode<synchronous>, transform_indices = @transform_3, window_bounds = array<i64: 16, 144>}, {pipeline_mode = #tpu.pipeline_mode<synchronous>, transform_indices = @transform_4, window_bounds = array<i64: 16, 1>}, {pipeline_mode = #tpu.pipeline_mode<synchronous>, transform_indices = @transform_5, window_bounds = array<i64: 1, 896>}, {pipeline_mode = #tpu.pipeline_mode<synchronous>, transform_indices = @transform_6, window_bounds = array<i64: 16, 768>}]} {
    %c0 = arith.constant 0 : index
    %c0_0 = arith.constant 0 : index
    %0 = vector.load %arg1[%c0, %c0_0] : memref<16x1024xbf16, #tpu.memory_space<vmem>>, vector<16x896xbf16>
    %c0_1 = arith.constant 0 : index
    %c0_2 = arith.constant 0 : index
    %1 = vector.load %arg8[%c0_1, %c0_2] : memref<144x896xbf16, #tpu.memory_space<vmem>>, vector<16x896xbf16>
    tpu.vector_store %arg8[%c0_1, %c0_2], %0 {strides = array<i32>} : memref<144x896xbf16, #tpu.memory_space<vmem>>, vector<16x896xbf16>,
    %c0_3 = arith.constant 0 : index
    %c1 = arith.constant 1 : index
    %2 = vector.load %arg1[%c0_3, %c1] : memref<16x1024xbf16, #tpu.memory_space<vmem>>, vector<16x896xbf16>
    %c16 = arith.constant 16 : index
    %c0_4 = arith.constant 0 : index
    %3 = vector.load %arg8[%c16, %c0_4] : memref<144x896xbf16, #tpu.memory_space<vmem>>, vector<16x896xbf16>
    tpu.vector_store %arg8[%c16, %c0_4], %2 {strides = array<i32>} : memref<144x896xbf16, #tpu.memory_space<vmem>>, vector<16x896xbf16>,
    %c0_5 = arith.constant 0 : index
    %c2 = arith.constant 2 : index
    %4 = vector.load %arg1[%c0_5, %c2] : memref<16x1024xbf16, #tpu.memory_space<vmem>>, vector<16x896xbf16>
    %c32 = arith.constant 32 : index
    %c0_6 = arith.constant 0 : index
    %5 = vector.load %arg8[%c32, %c0_6] : memref<144x896xbf16, #tpu.memory_space<vmem>>, vector<16x896xbf16>
    tpu.vector_store %arg8[%c32, %c0_6], %4 {strides = array<i32>} : memref<144x896xbf16, #tpu.memory_space<vmem>>, vector<16x896xbf16>,
    %c0_7 = arith.constant 0 : index
    %c18 = arith.constant 18 : index
    %6 = vector.load %arg1[%c0_7, %c18] : memref<16x1024xbf16, #tpu.memory_space<vmem>>, vector<16x896xbf16>
    %c48 = arith.constant 48 : index
    %c0_8 = arith.constant 0 : index
    %7 = vector.load %arg8[%c48, %c0_8] : memref<144x896xbf16, #tpu.memory_space<vmem>>, vector<16x896xbf16>
    tpu.vector_store %arg8[%c48, %c0_8], %6 {strides = array<i32>} : memref<144x896xbf16, #tpu.memory_space<vmem>>, vector<16x896xbf16>,
    %c0_9 = arith.constant 0 : index
    %c19 = arith.constant 19 : index
    %8 = vector.load %arg1[%c0_9, %c19] : memref<16x1024xbf16, #tpu.memory_space<vmem>>, vector<16x896xbf16>
    %c64 = arith.constant 64 : index
    %c0_10 = arith.constant 0 : index
    %9 = vector.load %arg8[%c64, %c0_10] : memref<144x896xbf16, #tpu.memory_space<vmem>>, vector<16x896xbf16>
    tpu.vector_store %arg8[%c64, %c0_10], %8 {strides = array<i32>} : memref<144x896xbf16, #tpu.memory_space<vmem>>, vector<16x896xbf16>,
    %c0_11 = arith.constant 0 : index
    %c20 = arith.constant 20 : index
    %10 = vector.load %arg1[%c0_11, %c20] : memref<16x1024xbf16, #tpu.memory_space<vmem>>, vector<16x896xbf16>
    %c80 = arith.constant 80 : index
    %c0_12 = arith.constant 0 : index
    %11 = vector.load %arg8[%c80, %c0_12] : memref<144x896xbf16, #tpu.memory_space<vmem>>, vector<16x896xbf16>
    tpu.vector_store %arg8[%c80, %c0_12], %10 {strides = array<i32>} : memref<144x896xbf16, #tpu.memory_space<vmem>>, vector<16x896xbf16>,
    %c0_13 = arith.constant 0 : index
    %c36 = arith.constant 36 : index
    %12 = vector.load %arg1[%c0_13, %c36] : memref<16x1024xbf16, #tpu.memory_space<vmem>>, vector<16x896xbf16>
    %c96 = arith.constant 96 : index
    %c0_14 = arith.constant 0 : index
    %13 = vector.load %arg8[%c96, %c0_14] : memref<144x896xbf16, #tpu.memory_space<vmem>>, vector<16x896xbf16>
    tpu.vector_store %arg8[%c96, %c0_14], %12 {strides = array<i32>} : memref<144x896xbf16, #tpu.memory_space<vmem>>, vector<16x896xbf16>,
    %c0_15 = arith.constant 0 : index
    %c37 = arith.constant 37 : index
    %14 = vector.load %arg1[%c0_15, %c37] : memref<16x1024xbf16, #tpu.memory_space<vmem>>, vector<16x896xbf16>
    %c112 = arith.constant 112 : index
    %c0_16 = arith.constant 0 : index
    %15 = vector.load %arg8[%c112, %c0_16] : memref<144x896xbf16, #tpu.memory_space<vmem>>, vector<16x896xbf16>
    tpu.vector_store %arg8[%c112, %c0_16], %14 {strides = array<i32>} : memref<144x896xbf16, #tpu.memory_space<vmem>>, vector<16x896xbf16>,
    %c0_17 = arith.constant 0 : index
    %c38 = arith.constant 38 : index
    %16 = vector.load %arg1[%c0_17, %c38] : memref<16x1024xbf16, #tpu.memory_space<vmem>>, vector<16x896xbf16>
    %c128 = arith.constant 128 : index
    %c0_18 = arith.constant 0 : index
    %17 = vector.load %arg8[%c128, %c0_18] : memref<144x896xbf16, #tpu.memory_space<vmem>>, vector<16x896xbf16>
    tpu.vector_store %arg8[%c128, %c0_18], %16 {strides = array<i32>} : memref<144x896xbf16, #tpu.memory_space<vmem>>, vector<16x896xbf16>,
    %c0_19 = arith.constant 0 : index
    %c0_20 = arith.constant 0 : index
    %18 = vector.load %arg2[%c0_19, %c0_20] : memref<16x144xbf16, #tpu.memory_space<vmem>>, vector<16x144xbf16>
    %c0_21 = arith.constant 0 : index
    %c0_22 = arith.constant 0 : index
    %19 = vector.load %arg8[%c0_21, %c0_22] : memref<144x896xbf16, #tpu.memory_space<vmem>>, vector<144x896xbf16>
    %cst = arith.constant dense<0.000000e+00> : vector<16x896xf32>
    %20 = tpu.matmul %18, %19, %cst {dimension_numbers = #tpu.dot_dimension_numbers<[1], [0], [0], [1], [0, 0, 1, 1], [], []>} : vector<16x144xbf16>, vector<144x896xbf16>, vector<16x896xf32> -> vector<16x896xf32>
    %c0_23 = arith.constant 0 : index
    %c0_24 = arith.constant 0 : index
    %21 = vector.load %arg3[%c0_23, %c0_24] : memref<16x1xf32, #tpu.memory_space<vmem>>, vector<16x1xf32>
    %22 = vector.broadcast %21 : vector<16x1xf32> to vector<16x896xf32>
    %23 = arith.addf %20, %22 : vector<16x896xf32>
    %cst_25 = arith.constant 0.000000e+00 : f32
    %24 = vector.broadcast %cst_25 : f32 to vector<16x896xf32>
    %25 = arith.maximumf %23, %24 : vector<16x896xf32>
    %c0_26 = arith.constant 0 : index
    %c0_27 = arith.constant 0 : index
    %26 = vector.load %arg6[%c0_26, %c0_27] : memref<1x896xf32, #tpu.memory_space<vmem>>, vector<1x896xf32>
    %27 = vector.broadcast %26 : vector<1x896xf32> to vector<16x896xf32>
    %28 = arith.mulf %25, %27 : vector<16x896xf32>
    %29 = arith.truncf %28 : vector<16x896xf32> to vector<16x896xbf16>
    %c0_28 = arith.constant 0 : index
    %c0_29 = arith.constant 0 : index
    %30 = vector.load %arg9[%c0_28, %c0_29] : memref<16x896xbf16, #tpu.memory_space<vmem>>, vector<16x896xbf16>
    tpu.vector_store %arg9[%c0_28, %c0_29], %29 {strides = array<i32>} : memref<16x896xbf16, #tpu.memory_space<vmem>>, vector<16x896xbf16>,
    %c0_30 = arith.constant 0 : index
    %c0_31 = arith.constant 0 : index
    %31 = vector.load %arg9[%c0_30, %c0_31] : memref<16x896xbf16, #tpu.memory_space<vmem>>, vector<16x768xbf16>
    %c0_32 = arith.constant 0 : index
    %c0_33 = arith.constant 0 : index
    %32 = vector.load %arg8[%c0_32, %c0_33] : memref<144x896xbf16, #tpu.memory_space<vmem>>, vector<16x768xbf16>
    tpu.vector_store %arg8[%c0_32, %c0_33], %31 {strides = array<i32>} : memref<144x896xbf16, #tpu.memory_space<vmem>>, vector<16x768xbf16>,
    %c0_34 = arith.constant 0 : index
    %c1_35 = arith.constant 1 : index
    %33 = vector.load %arg9[%c0_34, %c1_35] : memref<16x896xbf16, #tpu.memory_space<vmem>>, vector<16x768xbf16>
    %c16_36 = arith.constant 16 : index
    %c0_37 = arith.constant 0 : index
    %34 = vector.load %arg8[%c16_36, %c0_37] : memref<144x896xbf16, #tpu.memory_space<vmem>>, vector<16x768xbf16>
    tpu.vector_store %arg8[%c16_36, %c0_37], %33 {strides = array<i32>} : memref<144x896xbf16, #tpu.memory_space<vmem>>, vector<16x768xbf16>,
    %c0_38 = arith.constant 0 : index
    %c2_39 = arith.constant 2 : index
    %35 = vector.load %arg9[%c0_38, %c2_39] : memref<16x896xbf16, #tpu.memory_space<vmem>>, vector<16x768xbf16>
    %c32_40 = arith.constant 32 : index
    %c0_41 = arith.constant 0 : index
    %36 = vector.load %arg8[%c32_40, %c0_41] : memref<144x896xbf16, #tpu.memory_space<vmem>>, vector<16x768xbf16>
    tpu.vector_store %arg8[%c32_40, %c0_41], %35 {strides = array<i32>} : memref<144x896xbf16, #tpu.memory_space<vmem>>, vector<16x768xbf16>,
    %c0_42 = arith.constant 0 : index
    %c18_43 = arith.constant 18 : index
    %37 = vector.load %arg9[%c0_42, %c18_43] : memref<16x896xbf16, #tpu.memory_space<vmem>>, vector<16x768xbf16>
    %c48_44 = arith.constant 48 : index
    %c0_45 = arith.constant 0 : index
    %38 = vector.load %arg8[%c48_44, %c0_45] : memref<144x896xbf16, #tpu.memory_space<vmem>>, vector<16x768xbf16>
    tpu.vector_store %arg8[%c48_44, %c0_45], %37 {strides = array<i32>} : memref<144x896xbf16, #tpu.memory_space<vmem>>, vector<16x768xbf16>,
    %c0_46 = arith.constant 0 : index
    %c19_47 = arith.constant 19 : index
    %39 = vector.load %arg9[%c0_46, %c19_47] : memref<16x896xbf16, #tpu.memory_space<vmem>>, vector<16x768xbf16>
    %c64_48 = arith.constant 64 : index
    %c0_49 = arith.constant 0 : index
    %40 = vector.load %arg8[%c64_48, %c0_49] : memref<144x896xbf16, #tpu.memory_space<vmem>>, vector<16x768xbf16>
    tpu.vector_store %arg8[%c64_48, %c0_49], %39 {strides = array<i32>} : memref<144x896xbf16, #tpu.memory_space<vmem>>, vector<16x768xbf16>,
    %c0_50 = arith.constant 0 : index
    %c20_51 = arith.constant 20 : index
    %41 = vector.load %arg9[%c0_50, %c20_51] : memref<16x896xbf16, #tpu.memory_space<vmem>>, vector<16x768xbf16>
    %c80_52 = arith.constant 80 : index
    %c0_53 = arith.constant 0 : index
    %42 = vector.load %arg8[%c80_52, %c0_53] : memref<144x896xbf16, #tpu.memory_space<vmem>>, vector<16x768xbf16>
    tpu.vector_store %arg8[%c80_52, %c0_53], %41 {strides = array<i32>} : memref<144x896xbf16, #tpu.memory_space<vmem>>, vector<16x768xbf16>,
    %c0_54 = arith.constant 0 : index
    %c36_55 = arith.constant 36 : index
    %43 = vector.load %arg9[%c0_54, %c36_55] : memref<16x896xbf16, #tpu.memory_space<vmem>>, vector<16x768xbf16>
    %c96_56 = arith.constant 96 : index
    %c0_57 = arith.constant 0 : index
    %44 = vector.load %arg8[%c96_56, %c0_57] : memref<144x896xbf16, #tpu.memory_space<vmem>>, vector<16x768xbf16>
    tpu.vector_store %arg8[%c96_56, %c0_57], %43 {strides = array<i32>} : memref<144x896xbf16, #tpu.memory_space<vmem>>, vector<16x768xbf16>,
    %c0_58 = arith.constant 0 : index
    %c37_59 = arith.constant 37 : index
    %45 = vector.load %arg9[%c0_58, %c37_59] : memref<16x896xbf16, #tpu.memory_space<vmem>>, vector<16x768xbf16>
    %c112_60 = arith.constant 112 : index
    %c0_61 = arith.constant 0 : index
    %46 = vector.load %arg8[%c112_60, %c0_61] : memref<144x896xbf16, #tpu.memory_space<vmem>>, vector<16x768xbf16>
    tpu.vector_store %arg8[%c112_60, %c0_61], %45 {strides = array<i32>} : memref<144x896xbf16, #tpu.memory_space<vmem>>, vector<16x768xbf16>,
    %c0_62 = arith.constant 0 : index
    %c38_63 = arith.constant 38 : index
    %47 = vector.load %arg9[%c0_62, %c38_63] : memref<16x896xbf16, #tpu.memory_space<vmem>>, vector<16x768xbf16>
    %c128_64 = arith.constant 128 : index
    %c0_65 = arith.constant 0 : index
    %48 = vector.load %arg8[%c128_64, %c0_65] : memref<144x896xbf16, #tpu.memory_space<vmem>>, vector<16x768xbf16>
    tpu.vector_store %arg8[%c128_64, %c0_65], %47 {strides = array<i32>} : memref<144x896xbf16, #tpu.memory_space<vmem>>, vector<16x768xbf16>,
    %c0_66 = arith.constant 0 : index
    %c0_67 = arith.constant 0 : index
    %49 = vector.load %arg4[%c0_66, %c0_67] : memref<16x144xbf16, #tpu.memory_space<vmem>>, vector<16x144xbf16>
    %c0_68 = arith.constant 0 : index
    %c0_69 = arith.constant 0 : index
    %50 = vector.load %arg8[%c0_68, %c0_69] : memref<144x896xbf16, #tpu.memory_space<vmem>>, vector<144x768xbf16>
    %cst_70 = arith.constant dense<0.000000e+00> : vector<16x768xf32>
    %51 = tpu.matmul %49, %50, %cst_70 {dimension_numbers = #tpu.dot_dimension_numbers<[1], [0], [0], [1], [0, 0, 1, 1], [], []>} : vector<16x144xbf16>, vector<144x768xbf16>, vector<16x768xf32> -> vector<16x768xf32>
    %c0_71 = arith.constant 0 : index
    %c0_72 = arith.constant 0 : index
    %52 = vector.load %arg5[%c0_71, %c0_72] : memref<16x1xf32, #tpu.memory_space<vmem>>, vector<16x1xf32>
    %53 = vector.broadcast %52 : vector<16x1xf32> to vector<16x768xf32>
    %54 = arith.addf %51, %53 : vector<16x768xf32>
    %cst_73 = arith.constant 0.000000e+00 : f32
    %55 = vector.broadcast %cst_73 : f32 to vector<16x768xf32>
    %56 = arith.maximumf %54, %55 : vector<16x768xf32>
    %c0_74 = arith.constant 0 : index
    %c0_75 = arith.constant 0 : index
    %57 = vector.load %arg7[%c0_74, %c0_75] : memref<16x768xf32, #tpu.memory_space<vmem>>, vector<16x768xf32>
    tpu.vector_store %arg7[%c0_74, %c0_75], %56 {strides = array<i32>} : memref<16x768xf32, #tpu.memory_space<vmem>>, vector<16x768xf32>,
    return
  }
  func.func @transform_0(%arg0: i32) -> (i32, i32) {
    %c0_i32 = arith.constant 0 : i32
    %c0_i32_0 = arith.constant 0 : i32
    %c0_i32_1 = arith.constant 0 : i32
    return %c0_i32, %c0_i32_0 : i32, i32
  }
  func.func @transform_1(%arg0: i32) -> (i32, i32) {
    %c0_i32 = arith.constant 0 : i32
    %c0_i32_0 = arith.constant 0 : i32
    %c0_i32_1 = arith.constant 0 : i32
    return %c0_i32, %c0_i32_0 : i32, i32
  }
  func.func @transform_2(%arg0: i32) -> (i32, i32) {
    %c0_i32 = arith.constant 0 : i32
    %c0_i32_0 = arith.constant 0 : i32
    %c0_i32_1 = arith.constant 0 : i32
    return %c0_i32, %c0_i32_0 : i32, i32
  }
  func.func @transform_3(%arg0: i32) -> (i32, i32) {
    %c0_i32 = arith.constant 0 : i32
    %c0_i32_0 = arith.constant 0 : i32
    %c0_i32_1 = arith.constant 0 : i32
    return %c0_i32, %c0_i32_0 : i32, i32
  }
  func.func @transform_4(%arg0: i32) -> (i32, i32) {
    %c0_i32 = arith.constant 0 : i32
    %c0_i32_0 = arith.constant 0 : i32
    %c0_i32_1 = arith.constant 0 : i32
    return %c0_i32, %c0_i32_0 : i32, i32
  }
  func.func @transform_5(%arg0: i32) -> (i32, i32) {
    %c0_i32 = arith.constant 0 : i32
    %c0_i32_0 = arith.constant 0 : i32
    %c0_i32_1 = arith.constant 0 : i32
    return %c0_i32, %c0_i32_0 : i32, i32
  }
  func.func @transform_6(%arg0: i32) -> (i32, i32) {
    %c0_i32 = arith.constant 0 : i32
    %c0_i32_0 = arith.constant 0 : i32
    %c0_i32_1 = arith.constant 0 : i32
    return %c0_i32, %c0_i32_0 : i32, i32
  }
}

</mosaic_0001>

<llo_original>
// kernel: tpu_custom_call.1
$region0: #{tpu_custom_call.1}
  #allocation0 [shape = 'u32[]', space=smem, size = 0x4, offset = 0x4, fixed_abs, tag = 'smem constant byte address 0x4 - core index']
  #allocation1 [shape = 'u32[72,128]{1,0:T(1,128)}', space=vmem, size = 0x9000, scoped, tag = 'internal scratch']
  #allocation2 [shape = 'bf16[144,896]{1,0:T(8,128)(2,1)}', space=vmem, size = 0x3f000, scoped, tag = 'scratch operand']
  #allocation3 [shape = 'bf16[16,896]{1,0:T(8,128)(2,1)}', space=vmem, size = 0x7000, scoped, tag = 'scratch operand']
  %s0 = inlined_call_operand.hbm [shape: bf16[16,1024], index: 0, kind: input, shape index: {}]
  %s1 = inlined_call_operand.vmem [shape: bf16[16,144], index: 1, kind: input, shape index: {}]
  %s2 = inlined_call_operand.vmem [shape: f32[16,1], index: 2, kind: input, shape index: {}]
  %s3 = inlined_call_operand.vmem [shape: bf16[16,144], index: 3, kind: input, shape index: {}]
  %s4 = inlined_call_operand.vmem [shape: f32[16,1], index: 4, kind: input, shape index: {}]
  %s5 = inlined_call_operand.hbm [shape: f32[1,896], index: 5, kind: input, shape index: {}]
  %s6 = inlined_call_operand.hbm [shape: f32[16,768], index: 6, kind: output, shape index: {}]
  %s7 = sld [smem:[#allocation0]]
  $region42: #{tpu_custom_call.1} parent=0
    _
  %s9 = ssub.s32 1, %s7
  %s10 = scalar_select 0, %s9, %s7
  $region1: #{tpu_custom_call.1} parent=0
    #allocation4 [shape = 'u8[32768]{0}', space=vmem, size = 0x8000, scoped, tag = 'input window, operand 0, single buffered']
    #allocation5 [shape = 's32[1]{0}', space=sflag, size = 0x4, scoped, tag = 'scoped memory for tpu_custom_call.1']
    #allocation6 [shape = 's32[1]{0}', space=sflag, size = 0x4, scoped, tag = 'scoped memory for tpu_custom_call.1']
    #allocation7 [shape = 'u8[3584]{0}', space=vmem, size = 0x1000, scoped, tag = 'input window, operand 5, single buffered']
    #allocation8 [shape = 's32[1]{0}', space=sflag, size = 0x4, scoped, tag = 'scoped memory for tpu_custom_call.1']
    #allocation9 [shape = 'u8[49152]{0}', space=vmem, size = 0xc000, scoped, tag = 'output window, operand 0, single buffered']
    %11 = vsyncpa [#allocation5], 0
    %12 = vsyncpa [#allocation8], 0
    %13 = vsyncpa [#allocation6], 0
    // Predicated region
    $region2: #{tpu_custom_call.1} parent=1 // pred_check
      _
    $region3: #{tpu_custom_call.1} parent=1 // pred_check_branch
      %15 = sbr.rel (0) target = $region5
    $region4: #{tpu_custom_call.1} parent=1 // pred_region
      %17 = vsyncadd [#allocation5], 0
      %s18 = sshll.u32 %s0, 4
      %s19 = int_to_ptr.hbm [resolvable:$true] %s18
      %s20 = sshll.u32 [#allocation4], 4
      %s21 = int_to_ptr.vmem [resolvable:$true] %s20
      %26 = dma.hbm_to_vmem [thread:$0]  %s19, 1024, %s21, [#allocation5], 512, 512, 32
    $region5: #{tpu_custom_call.1} parent=1 // pred_fallthru
      _
    // Predicated region
    $region6: #{tpu_custom_call.1} parent=1 // pred_check
      _
    $region7: #{tpu_custom_call.1} parent=1 // pred_check_branch
      %28 = sbr.rel (0) target = $region9
    $region8: #{tpu_custom_call.1} parent=1 // pred_region
      _
    $region9: #{tpu_custom_call.1} parent=1 // pred_fallthru
      _
    // Predicated region
    $region10: #{tpu_custom_call.1} parent=1 // pred_check
      _
    $region11: #{tpu_custom_call.1} parent=1 // pred_check_branch
      %30 = sbr.rel (0) target = $region13
    $region12: #{tpu_custom_call.1} parent=1 // pred_region
      _
    $region13: #{tpu_custom_call.1} parent=1 // pred_fallthru
      _
    // Predicated region
    $region14: #{tpu_custom_call.1} parent=1 // pred_check
      _
    $region15: #{tpu_custom_call.1} parent=1 // pred_check_branch
      %32 = sbr.rel (0) target = $region17
    $region16: #{tpu_custom_call.1} parent=1 // pred_region
      _
    $region17: #{tpu_custom_call.1} parent=1 // pred_fallthru
      _
    // Predicated region
    $region18: #{tpu_custom_call.1} parent=1 // pred_check
      _
    $region19: #{tpu_custom_call.1} parent=1 // pred_check_branch
      %34 = sbr.rel (0) target = $region21
    $region20: #{tpu_custom_call.1} parent=1 // pred_region
      _
    $region21: #{tpu_custom_call.1} parent=1 // pred_fallthru
      _
    // Predicated region
    $region22: #{tpu_custom_call.1} parent=1 // pred_check
      _
    $region23: #{tpu_custom_call.1} parent=1 // pred_check_branch
      %36 = sbr.rel (0) target = $region25
    $region24: #{tpu_custom_call.1} parent=1 // pred_region
      %38 = vsyncadd [#allocation8], 0
      %s40 = sshll.u32 %s5, 4
      %s41 = int_to_ptr.hbm [resolvable:$true] %s40
      %s42 = sshll.u32 [#allocation7], 4
      %s43 = int_to_ptr.vmem [resolvable:$true] %s42
      %45 = dma.hbm_to_vmem [thread:$0]  %s41, 112, %s43, [#allocation8]
    $region25: #{tpu_custom_call.1} parent=1 // pred_fallthru
      _
    // Predicated region
    $region26: #{tpu_custom_call.1} parent=1 // pred_check
      _
    $region27: #{tpu_custom_call.1} parent=1 // pred_check_branch
      %47 = sbr.rel (0) target = $region29
    $region28: #{tpu_custom_call.1} parent=1 // pred_region
      %49 = dma.done [#allocation5], 1024
    $region29: #{tpu_custom_call.1} parent=1 // pred_fallthru
      _
    // Predicated region
    $region30: #{tpu_custom_call.1} parent=1 // pred_check
      _
    $region31: #{tpu_custom_call.1} parent=1 // pred_check_branch
      %51 = sbr.rel (0) target = $region33
    $region32: #{tpu_custom_call.1} parent=1 // pred_region
      %53 = dma.done [#allocation8], 112
    $region33: #{tpu_custom_call.1} parent=1 // pred_fallthru
      _
    %v55 = vld [vmem:[#allocation4] sm:$0xff]
    %v56 = vld [vmem:[#allocation4 + $0x8] sm:$0xff]
    %v57 = vld [vmem:[#allocation4 + $0x10] sm:$0xff]
    %v58 = vld [vmem:[#allocation4 + $0x18] sm:$0xf]
    %v59 = vld [vmem:[#allocation4 + $0x20] sm:$0xff]
    %v60 = vld [vmem:[#allocation4 + $0x28] sm:$0xff]
    %v61 = vld [vmem:[#allocation4 + $0x30] sm:$0xff]
    %v62 = vld [vmem:[#allocation4 + $0x38] sm:$0xf]
    %63 = vst [vmem:[#allocation2] sm:$0xff] %v55
    %64 = vst [vmem:[#allocation2 + $0x8] sm:$0xff] %v56
    %65 = vst [vmem:[#allocation2 + $0x10] sm:$0xff] %v57
    %66 = vst [vmem:[#allocation2 + $0x18] sm:$0xf] %v58
    %67 = vst [vmem:[#allocation2 + $0x1c] sm:$0xff] %v59
    %68 = vst [vmem:[#allocation2 + $0x24] sm:$0xff] %v60
    %69 = vst [vmem:[#allocation2 + $0x2c] sm:$0xff] %v61
    %70 = vst [vmem:[#allocation2 + $0x34] sm:$0xf] %v62
    %v71 = vld [vmem:[#allocation4] sm:$0xff]
    %v72 = vld [vmem:[#allocation4 + $0x8] sm:$0xff]
    %v73 = vld [vmem:[#allocation4 + $0x10] sm:$0xff]
    %v74 = vld [vmem:[#allocation4 + $0x18] sm:$0xff]
    %v75 = vld [vmem:[#allocation4 + $0x20] sm:$0xff]
    %v76 = vld [vmem:[#allocation4 + $0x28] sm:$0xff]
    %v77 = vld [vmem:[#allocation4 + $0x30] sm:$0xff]
    %v78 = vld [vmem:[#allocation4 + $0x38] sm:$0xff]
    %87 = vrot.lane.b32.xlu0 %v71, 127
    %v88 = vpop.permute.xlu0 %87
    %89 = vrot.lane.b32.xlu0 %v72, 127
    %v90 = vpop.permute.xlu0 %89
    %91 = vrot.lane.b32.xlu0 %v73, 127
    %v92 = vpop.permute.xlu0 %91
    %93 = vrot.lane.b32.xlu0 %v74, 127
    %v94 = vpop.permute.xlu0 %93
    %95 = vrot.lane.b32.xlu0 %v75, 127
    %v96 = vpop.permute.xlu0 %95
    %97 = vrot.lane.b32.xlu0 %v76, 127
    %v98 = vpop.permute.xlu0 %97
    %99 = vrot.lane.b32.xlu0 %v77, 127
    %v100 = vpop.permute.xlu0 %99
    %101 = vrot.lane.b32.xlu0 %v78, 127
    %v102 = vpop.permute.xlu0 %101
    %v103 = vrot.slane %v88, 4
    %v104 = vrot.slane %v90, 4
    %v105 = vrot.slane %v92, 4
    %v106 = vrot.slane %v94, 4
    %v107 = vrot.slane %v96, 4
    %v108 = vrot.slane %v98, 4
    %v109 = vrot.slane %v100, 4
    %v110 = vrot.slane %v102, 4
    %vm111 = vcmask 1043456
    %v112 = vsel %vm111, %v103, %v104
    %vm113 = vcmask 1039360
    %v114 = vsel %vm113, %v88, %v112
    %v115 = vsel %vm111, %v104, %v105
    %v116 = vsel %vm113, %v90, %v115
    %v117 = vsel %vm111, %v105, %v106
    %v118 = vsel %vm113, %v92, %v117
    %v119 = vsel %vm113, %v94, %v106
    %v120 = vsel %vm111, %v107, %v108
    %v121 = vsel %vm113, %v96, %v120
    %v122 = vsel %vm111, %v108, %v109
    %v123 = vsel %vm113, %v98, %v122
    %v124 = vsel %vm111, %v109, %v110
    %v125 = vsel %vm113, %v100, %v124
    %v126 = vsel %vm113, %v102, %v110
    %135 = vst [vmem:[#allocation2 + $0x38] sm:$0xff] %v114
    %136 = vst [vmem:[#allocation2 + $0x40] sm:$0xff] %v116
    %137 = vst [vmem:[#allocation2 + $0x48] sm:$0xff] %v118
    %138 = vst [vmem:[#allocation2 + $0x50] sm:$0xf] %v119
    %139 = vst [vmem:[#allocation2 + $0x54] sm:$0xff] %v121
    %140 = vst [vmem:[#allocation2 + $0x5c] sm:$0xff] %v123
    %141 = vst [vmem:[#allocation2 + $0x64] sm:$0xff] %v125
    %142 = vst [vmem:[#allocation2 + $0x6c] sm:$0xf] %v126
    %v143 = vld [vmem:[#allocation4] sm:$0xff]
    %v144 = vld [vmem:[#allocation4 + $0x8] sm:$0xff]
    %v145 = vld [vmem:[#allocation4 + $0x10] sm:$0xff]
    %v146 = vld [vmem:[#allocation4 + $0x18] sm:$0xff]
    %v147 = vld [vmem:[#allocation4 + $0x20] sm:$0xff]
    %v148 = vld [vmem:[#allocation4 + $0x28] sm:$0xff]
    %v149 = vld [vmem:[#allocation4 + $0x30] sm:$0xff]
    %v150 = vld [vmem:[#allocation4 + $0x38] sm:$0xff]
    %159 = vrot.lane.b32.xlu0 %v143, 126
    %v160 = vpop.permute.xlu0 %159
    %161 = vrot.lane.b32.xlu0 %v144, 126
    %v162 = vpop.permute.xlu0 %161
    %163 = vrot.lane.b32.xlu0 %v145, 126
    %v164 = vpop.permute.xlu0 %163
    %165 = vrot.lane.b32.xlu0 %v146, 126
    %v166 = vpop.permute.xlu0 %165
    %167 = vrot.lane.b32.xlu0 %v147, 126
    %v168 = vpop.permute.xlu0 %167
    %169 = vrot.lane.b32.xlu0 %v148, 126
    %v170 = vpop.permute.xlu0 %169
    %171 = vrot.lane.b32.xlu0 %v149, 126
    %v172 = vpop.permute.xlu0 %171
    %173 = vrot.lane.b32.xlu0 %v150, 126
    %v174 = vpop.permute.xlu0 %173
    %v175 = vrot.slane %v160, 4
    %v176 = vrot.slane %v162, 4
    %v177 = vrot.slane %v164, 4
    %v178 = vrot.slane %v166, 4
    %v179 = vrot.slane %v168, 4
    %v180 = vrot.slane %v170, 4
    %v181 = vrot.slane %v172, 4
    %v182 = vrot.slane %v174, 4
    %v183 = vsel %vm111, %v175, %v176
    %vm184 = vcmask 1031168
    %v185 = vsel %vm184, %v160, %v183
    %v186 = vsel %vm111, %v176, %v177
    %v187 = vsel %vm184, %v162, %v186
    %v188 = vsel %vm111, %v177, %v178
    %v189 = vsel %vm184, %v164, %v188
    %v190 = vsel %vm184, %v166, %v178
    %v191 = vsel %vm111, %v179, %v180
    %v192 = vsel %vm184, %v168, %v191
    %v193 = vsel %vm111, %v180, %v181
    %v194 = vsel %vm184, %v170, %v193
    %v195 = vsel %vm111, %v181, %v182
    %v196 = vsel %vm184, %v172, %v195
    %v197 = vsel %vm184, %v174, %v182
    %206 = vst [vmem:[#allocation2 + $0x70] sm:$0xff] %v185
    %207 = vst [vmem:[#allocation2 + $0x78] sm:$0xff] %v187
    %208 = vst [vmem:[#allocation2 + $0x80] sm:$0xff] %v189
    %209 = vst [vmem:[#allocation2 + $0x88] sm:$0xf] %v190
    %210 = vst [vmem:[#allocation2 + $0x8c] sm:$0xff] %v192
    %211 = vst [vmem:[#allocation2 + $0x94] sm:$0xff] %v194
    %212 = vst [vmem:[#allocation2 + $0x9c] sm:$0xff] %v196
    %213 = vst [vmem:[#allocation2 + $0xa4] sm:$0xf] %v197
    %v214 = vld [vmem:[#allocation4] sm:$0xff]
    %v215 = vld [vmem:[#allocation4 + $0x8] sm:$0xff]
    %v216 = vld [vmem:[#allocation4 + $0x10] sm:$0xff]
    %v217 = vld [vmem:[#allocation4 + $0x18] sm:$0xff]
    %v218 = vld [vmem:[#allocation4 + $0x20] sm:$0xff]
    %v219 = vld [vmem:[#allocation4 + $0x28] sm:$0xff]
    %v220 = vld [vmem:[#allocation4 + $0x30] sm:$0xff]
    %v221 = vld [vmem:[#allocation4 + $0x38] sm:$0xff]
    %230 = vrot.lane.b32.xlu0 %v214, 110
    %v231 = vpop.permute.xlu0 %230
    %232 = vrot.lane.b32.xlu0 %v215, 110
    %v233 = vpop.permute.xlu0 %232
    %234 = vrot.lane.b32.xlu0 %v216, 110
    %v235 = vpop.permute.xlu0 %234
    %236 = vrot.lane.b32.xlu0 %v217, 110
    %v237 = vpop.permute.xlu0 %236
    %238 = vrot.lane.b32.xlu0 %v218, 110
    %v239 = vpop.permute.xlu0 %238
    %240 = vrot.lane.b32.xlu0 %v219, 110
    %v241 = vpop.permute.xlu0 %240
    %242 = vrot.lane.b32.xlu0 %v220, 110
    %v243 = vpop.permute.xlu0 %242
    %244 = vrot.lane.b32.xlu0 %v221, 110
    %v245 = vpop.permute.xlu0 %244
    %v246 = vrot.slane %v231, 4
    %v247 = vrot.slane %v233, 4
    %v248 = vrot.slane %v235, 4
    %v249 = vrot.slane %v237, 4
    %v250 = vrot.slane %v239, 4
    %v251 = vrot.slane %v241, 4
    %v252 = vrot.slane %v243, 4
    %v253 = vrot.slane %v245, 4
    %v254 = vsel %vm111, %v246, %v247
    %vm255 = vcmask 900096
    %v256 = vsel %vm255, %v231, %v254
    %v257 = vsel %vm111, %v247, %v248
    %v258 = vsel %vm255, %v233, %v257
    %v259 = vsel %vm111, %v248, %v249
    %v260 = vsel %vm255, %v235, %v259
    %v261 = vsel %vm255, %v237, %v249
    %v262 = vsel %vm111, %v250, %v251
    %v263 = vsel %vm255, %v239, %v262
    %v264 = vsel %vm111, %v251, %v252
    %v265 = vsel %vm255, %v241, %v264
    %v266 = vsel %vm111, %v252, %v253
    %v267 = vsel %vm255, %v243, %v266
    %v268 = vsel %vm255, %v245, %v253
    %277 = vst [vmem:[#allocation2 + $0xa8] sm:$0xff] %v256
    %278 = vst [vmem:[#allocation2 + $0xb0] sm:$0xff] %v258
    %279 = vst [vmem:[#allocation2 + $0xb8] sm:$0xff] %v260
    %280 = vst [vmem:[#allocation2 + $0xc0] sm:$0xf] %v261
    %281 = vst [vmem:[#allocation2 + $0xc4] sm:$0xff] %v263
    %282 = vst [vmem:[#allocation2 + $0xcc] sm:$0xff] %v265
    %283 = vst [vmem:[#allocation2 + $0xd4] sm:$0xff] %v267
    %284 = vst [vmem:[#allocation2 + $0xdc] sm:$0xf] %v268
    %v285 = vld [vmem:[#allocation4] sm:$0xff]
    %v286 = vld [vmem:[#allocation4 + $0x8] sm:$0xff]
    %v287 = vld [vmem:[#allocation4 + $0x10] sm:$0xff]
    %v288 = vld [vmem:[#allocation4 + $0x18] sm:$0xff]
    %v289 = vld [vmem:[#allocation4 + $0x20] sm:$0xff]
    %v290 = vld [vmem:[#allocation4 + $0x28] sm:$0xff]
    %v291 = vld [vmem:[#allocation4 + $0x30] sm:$0xff]
    %v292 = vld [vmem:[#allocation4 + $0x38] sm:$0xff]
    %301 = vrot.lane.b32.xlu0 %v285, 109
    %v302 = vpop.permute.xlu0 %301
    %303 = vrot.lane.b32.xlu0 %v286, 109
    %v304 = vpop.permute.xlu0 %303
    %305 = vrot.lane.b32.xlu0 %v287, 109
    %v306 = vpop.permute.xlu0 %305
    %307 = vrot.lane.b32.xlu0 %v288, 109
    %v308 = vpop.permute.xlu0 %307
    %309 = vrot.lane.b32.xlu0 %v289, 109
    %v310 = vpop.permute.xlu0 %309
    %311 = vrot.lane.b32.xlu0 %v290, 109
    %v312 = vpop.permute.xlu0 %311
    %313 = vrot.lane.b32.xlu0 %v291, 109
    %v314 = vpop.permute.xlu0 %313
    %315 = vrot.lane.b32.xlu0 %v292, 109
    %v316 = vpop.permute.xlu0 %315
    %v317 = vrot.slane %v302, 4
    %v318 = vrot.slane %v304, 4
    %v319 = vrot.slane %v306, 4
    %v320 = vrot.slane %v308, 4
    %v321 = vrot.slane %v310, 4
    %v322 = vrot.slane %v312, 4
    %v323 = vrot.slane %v314, 4
    %v324 = vrot.slane %v316, 4
    %v325 = vsel %vm111, %v317, %v318
    %vm326 = vcmask 891904
    %v327 = vsel %vm326, %v302, %v325
    %v328 = vsel %vm111, %v318, %v319
    %v329 = vsel %vm326, %v304, %v328
    %v330 = vsel %vm111, %v319, %v320
    %v331 = vsel %vm326, %v306, %v330
    %v332 = vsel %vm326, %v308, %v320
    %v333 = vsel %vm111, %v321, %v322
    %v334 = vsel %vm326, %v310, %v333
    %v335 = vsel %vm111, %v322, %v323
    %v336 = vsel %vm326, %v312, %v335
    %v337 = vsel %vm111, %v323, %v324
    %v338 = vsel %vm326, %v314, %v337
    %v339 = vsel %vm326, %v316, %v324
    %348 = vst [vmem:[#allocation2 + $0xe0] sm:$0xff] %v327
    %349 = vst [vmem:[#allocation2 + $0xe8] sm:$0xff] %v329
    %350 = vst [vmem:[#allocation2 + $0xf0] sm:$0xff] %v331
    %351 = vst [vmem:[#allocation2 + $0xf8] sm:$0xf] %v332
    %352 = vst [vmem:[#allocation2 + $0xfc] sm:$0xff] %v334
    %353 = vst [vmem:[#allocation2 + $0x104] sm:$0xff] %v336
    %354 = vst [vmem:[#allocation2 + $0x10c] sm:$0xff] %v338
    %355 = vst [vmem:[#allocation2 + $0x114] sm:$0xf] %v339
    %v356 = vld [vmem:[#allocation4] sm:$0xff]
    %v357 = vld [vmem:[#allocation4 + $0x8] sm:$0xff]
    %v358 = vld [vmem:[#allocation4 + $0x10] sm:$0xff]
    %v359 = vld [vmem:[#allocation4 + $0x18] sm:$0xff]
    %v360 = vld [vmem:[#allocation4 + $0x20] sm:$0xff]
    %v361 = vld [vmem:[#allocation4 + $0x28] sm:$0xff]
    %v362 = vld [vmem:[#allocation4 + $0x30] sm:$0xff]
    %v363 = vld [vmem:[#allocation4 + $0x38] sm:$0xff]
    %372 = vrot.lane.b32.xlu0 %v356, 108
    %v373 = vpop.permute.xlu0 %372
    %374 = vrot.lane.b32.xlu0 %v357, 108
    %v375 = vpop.permute.xlu0 %374
    %376 = vrot.lane.b32.xlu0 %v358, 108
    %v377 = vpop.permute.xlu0 %376
    %378 = vrot.lane.b32.xlu0 %v359, 108
    %v379 = vpop.permute.xlu0 %378
    %380 = vrot.lane.b32.xlu0 %v360, 108
    %v381 = vpop.permute.xlu0 %380
    %382 = vrot.lane.b32.xlu0 %v361, 108
    %v383 = vpop.permute.xlu0 %382
    %384 = vrot.lane.b32.xlu0 %v362, 108
    %v385 = vpop.permute.xlu0 %384
    %386 = vrot.lane.b32.xlu0 %v363, 108
    %v387 = vpop.permute.xlu0 %386
    %v388 = vrot.slane %v373, 4
    %v389 = vrot.slane %v375, 4
    %v390 = vrot.slane %v377, 4
    %v391 = vrot.slane %v379, 4
    %v392 = vrot.slane %v381, 4
    %v393 = vrot.slane %v383, 4
    %v394 = vrot.slane %v385, 4
    %v395 = vrot.slane %v387, 4
    %v396 = vsel %vm111, %v388, %v389
    %vm397 = vcmask 883712
    %v398 = vsel %vm397, %v373, %v396
    %v399 = vsel %vm111, %v389, %v390
    %v400 = vsel %vm397, %v375, %v399
    %v401 = vsel %vm111, %v390, %v391
    %v402 = vsel %vm397, %v377, %v401
    %v403 = vsel %vm397, %v379, %v391
    %v404 = vsel %vm111, %v392, %v393
    %v405 = vsel %vm397, %v381, %v404
    %v406 = vsel %vm111, %v393, %v394
    %v407 = vsel %vm397, %v383, %v406
    %v408 = vsel %vm111, %v394, %v395
    %v409 = vsel %vm397, %v385, %v408
    %v410 = vsel %vm397, %v387, %v395
    %419 = vst [vmem:[#allocation2 + $0x118] sm:$0xff] %v398
    %420 = vst [vmem:[#allocation2 + $0x120] sm:$0xff] %v400
    %421 = vst [vmem:[#allocation2 + $0x128] sm:$0xff] %v402
    %422 = vst [vmem:[#allocation2 + $0x130] sm:$0xf] %v403
    %423 = vst [vmem:[#allocation2 + $0x134] sm:$0xff] %v405
    %424 = vst [vmem:[#allocation2 + $0x13c] sm:$0xff] %v407
    %425 = vst [vmem:[#allocation2 + $0x144] sm:$0xff] %v409
    %426 = vst [vmem:[#allocation2 + $0x14c] sm:$0xf] %v410
    %v427 = vld [vmem:[#allocation4] sm:$0xff]
    %v428 = vld [vmem:[#allocation4 + $0x8] sm:$0xff]
    %v429 = vld [vmem:[#allocation4 + $0x10] sm:$0xff]
    %v430 = vld [vmem:[#allocation4 + $0x18] sm:$0xff]
    %v431 = vld [vmem:[#allocation4 + $0x20] sm:$0xff]
    %v432 = vld [vmem:[#allocation4 + $0x28] sm:$0xff]
    %v433 = vld [vmem:[#allocation4 + $0x30] sm:$0xff]
    %v434 = vld [vmem:[#allocation4 + $0x38] sm:$0xff]
    %443 = vrot.lane.b32.xlu0 %v427, 92
    %v444 = vpop.permute.xlu0 %443
    %445 = vrot.lane.b32.xlu0 %v428, 92
    %v446 = vpop.permute.xlu0 %445
    %447 = vrot.lane.b32.xlu0 %v429, 92
    %v448 = vpop.permute.xlu0 %447
    %449 = vrot.lane.b32.xlu0 %v430, 92
    %v450 = vpop.permute.xlu0 %449
    %451 = vrot.lane.b32.xlu0 %v431, 92
    %v452 = vpop.permute.xlu0 %451
    %453 = vrot.lane.b32.xlu0 %v432, 92
    %v454 = vpop.permute.xlu0 %453
    %455 = vrot.lane.b32.xlu0 %v433, 92
    %v456 = vpop.permute.xlu0 %455
    %457 = vrot.lane.b32.xlu0 %v434, 92
    %v458 = vpop.permute.xlu0 %457
    %v459 = vrot.slane %v444, 4
    %v460 = vrot.slane %v446, 4
    %v461 = vrot.slane %v448, 4
    %v462 = vrot.slane %v450, 4
    %v463 = vrot.slane %v452, 4
    %v464 = vrot.slane %v454, 4
    %v465 = vrot.slane %v456, 4
    %v466 = vrot.slane %v458, 4
    %v467 = vsel %vm111, %v459, %v460
    %vm468 = vcmask 752640
    %v469 = vsel %vm468, %v444, %v467
    %v470 = vsel %vm111, %v460, %v461
    %v471 = vsel %vm468, %v446, %v470
    %v472 = vsel %vm111, %v461, %v462
    %v473 = vsel %vm468, %v448, %v472
    %v474 = vsel %vm468, %v450, %v462
    %v475 = vsel %vm111, %v463, %v464
    %v476 = vsel %vm468, %v452, %v475
    %v477 = vsel %vm111, %v464, %v465
    %v478 = vsel %vm468, %v454, %v477
    %v479 = vsel %vm111, %v465, %v466
    %v480 = vsel %vm468, %v456, %v479
    %v481 = vsel %vm468, %v458, %v466
    %490 = vst [vmem:[#allocation2 + $0x150] sm:$0xff] %v469
    %491 = vst [vmem:[#allocation2 + $0x158] sm:$0xff] %v471
    %492 = vst [vmem:[#allocation2 + $0x160] sm:$0xff] %v473
    %493 = vst [vmem:[#allocation2 + $0x168] sm:$0xf] %v474
    %494 = vst [vmem:[#allocation2 + $0x16c] sm:$0xff] %v476
    %495 = vst [vmem:[#allocation2 + $0x174] sm:$0xff] %v478
    %496 = vst [vmem:[#allocation2 + $0x17c] sm:$0xff] %v480
    %497 = vst [vmem:[#allocation2 + $0x184] sm:$0xf] %v481
    %v498 = vld [vmem:[#allocation4] sm:$0xff]
    %v499 = vld [vmem:[#allocation4 + $0x8] sm:$0xff]
    %v500 = vld [vmem:[#allocation4 + $0x10] sm:$0xff]
    %v501 = vld [vmem:[#allocation4 + $0x18] sm:$0xff]
    %v502 = vld [vmem:[#allocation4 + $0x20] sm:$0xff]
    %v503 = vld [vmem:[#allocation4 + $0x28] sm:$0xff]
    %v504 = vld [vmem:[#allocation4 + $0x30] sm:$0xff]
    %v505 = vld [vmem:[#allocation4 + $0x38] sm:$0xff]
    %514 = vrot.lane.b32.xlu0 %v498, 91
    %v515 = vpop.permute.xlu0 %514
    %516 = vrot.lane.b32.xlu0 %v499, 91
    %v517 = vpop.permute.xlu0 %516
    %518 = vrot.lane.b32.xlu0 %v500, 91
    %v519 = vpop.permute.xlu0 %518
    %520 = vrot.lane.b32.xlu0 %v501, 91
    %v521 = vpop.permute.xlu0 %520
    %522 = vrot.lane.b32.xlu0 %v502, 91
    %v523 = vpop.permute.xlu0 %522
    %524 = vrot.lane.b32.xlu0 %v503, 91
    %v525 = vpop.permute.xlu0 %524
    %526 = vrot.lane.b32.xlu0 %v504, 91
    %v527 = vpop.permute.xlu0 %526
    %528 = vrot.lane.b32.xlu0 %v505, 91
    %v529 = vpop.permute.xlu0 %528
    %v530 = vrot.slane %v515, 4
    %v531 = vrot.slane %v517, 4
    %v532 = vrot.slane %v519, 4
    %v533 = vrot.slane %v521, 4
    %v534 = vrot.slane %v523, 4
    %v535 = vrot.slane %v525, 4
    %v536 = vrot.slane %v527, 4
    %v537 = vrot.slane %v529, 4
    %v538 = vsel %vm111, %v530, %v531
    %vm539 = vcmask 744448
    %v540 = vsel %vm539, %v515, %v538
    %v541 = vsel %vm111, %v531, %v532
    %v542 = vsel %vm539, %v517, %v541
    %v543 = vsel %vm111, %v532, %v533
    %v544 = vsel %vm539, %v519, %v543
    %v545 = vsel %vm539, %v521, %v533
    %v546 = vsel %vm111, %v534, %v535
    %v547 = vsel %vm539, %v523, %v546
    %v548 = vsel %vm111, %v535, %v536
    %v549 = vsel %vm539, %v525, %v548
    %v550 = vsel %vm111, %v536, %v537
    %v551 = vsel %vm539, %v527, %v550
    %v552 = vsel %vm539, %v529, %v537
    %561 = vst [vmem:[#allocation2 + $0x188] sm:$0xff] %v540
    %562 = vst [vmem:[#allocation2 + $0x190] sm:$0xff] %v542
    %563 = vst [vmem:[#allocation2 + $0x198] sm:$0xff] %v544
    %564 = vst [vmem:[#allocation2 + $0x1a0] sm:$0xf] %v545
    %565 = vst [vmem:[#allocation2 + $0x1a4] sm:$0xff] %v547
    %566 = vst [vmem:[#allocation2 + $0x1ac] sm:$0xff] %v549
    %567 = vst [vmem:[#allocation2 + $0x1b4] sm:$0xff] %v551
    %568 = vst [vmem:[#allocation2 + $0x1bc] sm:$0xf] %v552
    %v569 = vld [vmem:[#allocation4] sm:$0xff]
    %v570 = vld [vmem:[#allocation4 + $0x8] sm:$0xff]
    %v571 = vld [vmem:[#allocation4 + $0x10] sm:$0xff]
    %v572 = vld [vmem:[#allocation4 + $0x18] sm:$0xff]
    %v573 = vld [vmem:[#allocation4 + $0x20] sm:$0xff]
    %v574 = vld [vmem:[#allocation4 + $0x28] sm:$0xff]
    %v575 = vld [vmem:[#allocation4 + $0x30] sm:$0xff]
    %v576 = vld [vmem:[#allocation4 + $0x38] sm:$0xff]
    %585 = vrot.lane.b32.xlu0 %v569, 90
    %v586 = vpop.permute.xlu0 %585
    %587 = vrot.lane.b32.xlu0 %v570, 90
    %v588 = vpop.permute.xlu0 %587
    %589 = vrot.lane.b32.xlu0 %v571, 90
    %v590 = vpop.permute.xlu0 %589
    %591 = vrot.lane.b32.xlu0 %v572, 90
    %v592 = vpop.permute.xlu0 %591
    %593 = vrot.lane.b32.xlu0 %v573, 90
    %v594 = vpop.permute.xlu0 %593
    %595 = vrot.lane.b32.xlu0 %v574, 90
    %v596 = vpop.permute.xlu0 %595
    %597 = vrot.lane.b32.xlu0 %v575, 90
    %v598 = vpop.permute.xlu0 %597
    %599 = vrot.lane.b32.xlu0 %v576, 90
    %v600 = vpop.permute.xlu0 %599
    %v601 = vrot.slane %v586, 4
    %v602 = vrot.slane %v588, 4
    %v603 = vrot.slane %v590, 4
    %v604 = vrot.slane %v592, 4
    %v605 = vrot.slane %v594, 4
    %v606 = vrot.slane %v596, 4
    %v607 = vrot.slane %v598, 4
    %v608 = vrot.slane %v600, 4
    %v609 = vsel %vm111, %v601, %v602
    %vm610 = vcmask 736256
    %v611 = vsel %vm610, %v586, %v609
    %v612 = vsel %vm111, %v602, %v603
    %v613 = vsel %vm610, %v588, %v612
    %v614 = vsel %vm111, %v603, %v604
    %v615 = vsel %vm610, %v590, %v614
    %v616 = vsel %vm610, %v592, %v604
    %v617 = vsel %vm111, %v605, %v606
    %v618 = vsel %vm610, %v594, %v617
    %v619 = vsel %vm111, %v606, %v607
    %v620 = vsel %vm610, %v596, %v619
    %v621 = vsel %vm111, %v607, %v608
    %v622 = vsel %vm610, %v598, %v621
    %v623 = vsel %vm610, %v600, %v608
    %632 = vst [vmem:[#allocation2 + $0x1c0] sm:$0xff] %v611
    %633 = vst [vmem:[#allocation2 + $0x1c8] sm:$0xff] %v613
    %634 = vst [vmem:[#allocation2 + $0x1d0] sm:$0xff] %v615
    %635 = vst [vmem:[#allocation2 + $0x1d8] sm:$0xf] %v616
    %636 = vst [vmem:[#allocation2 + $0x1dc] sm:$0xff] %v618
    %637 = vst [vmem:[#allocation2 + $0x1e4] sm:$0xff] %v620
    %638 = vst [vmem:[#allocation2 + $0x1ec] sm:$0xff] %v622
    %639 = vst [vmem:[#allocation2 + $0x1f4] sm:$0xf] %v623
    %v640 = vld [vmem:[%s1] sm:$0xff]
    %v641 = vld [vmem:[%s1 + $0x8] sm:$0xff]
    %v642 = vld [vmem:[#allocation2] sm:$0xff]
    %v643 = vld [vmem:[#allocation2 + $0x8] sm:$0xff]
    %v644 = vld [vmem:[#allocation2 + $0x10] sm:$0xff]
    %v645 = vld [vmem:[#allocation2 + $0x18] sm:$0xf]
    %v646 = vld [vmem:[#allocation2 + $0x1c] sm:$0xff]
    %v647 = vld [vmem:[#allocation2 + $0x24] sm:$0xff]
    %v648 = vld [vmem:[#allocation2 + $0x2c] sm:$0xff]
    %v649 = vld [vmem:[#allocation2 + $0x34] sm:$0xf]
    %v650 = vld [vmem:[#allocation2 + $0x38] sm:$0xff]
    %v651 = vld [vmem:[#allocation2 + $0x40] sm:$0xff]
    %v652 = vld [vmem:[#allocation2 + $0x48] sm:$0xff]
    %v653 = vld [vmem:[#allocation2 + $0x50] sm:$0xf]
    %v654 = vld [vmem:[#allocation2 + $0x54] sm:$0xff]
    %v655 = vld [vmem:[#allocation2 + $0x5c] sm:$0xff]
    %v656 = vld [vmem:[#allocation2 + $0x64] sm:$0xff]
    %v657 = vld [vmem:[#allocation2 + $0x6c] sm:$0xf]
    %v658 = vld [vmem:[#allocation2 + $0x70] sm:$0xff]
    %v659 = vld [vmem:[#allocation2 + $0x78] sm:$0xff]
    %v660 = vld [vmem:[#allocation2 + $0x80] sm:$0xff]
    %v661 = vld [vmem:[#allocation2 + $0x88] sm:$0xf]
    %v662 = vld [vmem:[#allocation2 + $0x8c] sm:$0xff]
    %v663 = vld [vmem:[#allocation2 + $0x94] sm:$0xff]
    %v664 = vld [vmem:[#allocation2 + $0x9c] sm:$0xff]
    %v665 = vld [vmem:[#allocation2 + $0xa4] sm:$0xf]
    %v666 = vld [vmem:[#allocation2 + $0xa8] sm:$0xff]
    %v667 = vld [vmem:[#allocation2 + $0xb0] sm:$0xff]
    %v668 = vld [vmem:[#allocation2 + $0xb8] sm:$0xff]
    %v669 = vld [vmem:[#allocation2 + $0xc0] sm:$0xf]
    %v670 = vld [vmem:[#allocation2 + $0xc4] sm:$0xff]
    %v671 = vld [vmem:[#allocation2 + $0xcc] sm:$0xff]
    %v672 = vld [vmem:[#allocation2 + $0xd4] sm:$0xff]
    %v673 = vld [vmem:[#allocation2 + $0xdc] sm:$0xf]
    %v674 = vld [vmem:[#allocation2 + $0xe0] sm:$0xff]
    %v675 = vld [vmem:[#allocation2 + $0xe8] sm:$0xff]
    %v676 = vld [vmem:[#allocation2 + $0xf0] sm:$0xff]
    %v677 = vld [vmem:[#allocation2 + $0xf8] sm:$0xf]
    %v678 = vld [vmem:[#allocation2 + $0xfc] sm:$0xff]
    %v679 = vld [vmem:[#allocation2 + $0x104] sm:$0xff]
    %v680 = vld [vmem:[#allocation2 + $0x10c] sm:$0xff]
    %v681 = vld [vmem:[#allocation2 + $0x114] sm:$0xf]
    %v682 = vld [vmem:[#allocation2 + $0x118] sm:$0xff]
    %v683 = vld [vmem:[#allocation2 + $0x120] sm:$0xff]
    %v684 = vld [vmem:[#allocation2 + $0x128] sm:$0xff]
    %v685 = vld [vmem:[#allocation2 + $0x130] sm:$0xf]
    %v686 = vld [vmem:[#allocation2 + $0x134] sm:$0xff]
    %v687 = vld [vmem:[#allocation2 + $0x13c] sm:$0xff]
    %v688 = vld [vmem:[#allocation2 + $0x144] sm:$0xff]
    %v689 = vld [vmem:[#allocation2 + $0x14c] sm:$0xf]
    %v690 = vld [vmem:[#allocation2 + $0x150] sm:$0xff]
    %v691 = vld [vmem:[#allocation2 + $0x158] sm:$0xff]
    %v692 = vld [vmem:[#allocation2 + $0x160] sm:$0xff]
    %v693 = vld [vmem:[#allocation2 + $0x168] sm:$0xf]
    %v694 = vld [vmem:[#allocation2 + $0x16c] sm:$0xff]
    %v695 = vld [vmem:[#allocation2 + $0x174] sm:$0xff]
    %v696 = vld [vmem:[#allocation2 + $0x17c] sm:$0xff]
    %v697 = vld [vmem:[#allocation2 + $0x184] sm:$0xf]
    %v698 = vld [vmem:[#allocation2 + $0x188] sm:$0xff]
    %v699 = vld [vmem:[#allocation2 + $0x190] sm:$0xff]
    %v700 = vld [vmem:[#allocation2 + $0x198] sm:$0xff]
    %v701 = vld [vmem:[#allocation2 + $0x1a0] sm:$0xf]
    %v702 = vld [vmem:[#allocation2 + $0x1a4] sm:$0xff]
    %v703 = vld [vmem:[#allocation2 + $0x1ac] sm:$0xff]
    %v704 = vld [vmem:[#allocation2 + $0x1b4] sm:$0xff]
    %v705 = vld [vmem:[#allocation2 + $0x1bc] sm:$0xf]
    %v706 = vld [vmem:[#allocation2 + $0x1c0] sm:$0xff]
    %v707 = vld [vmem:[#allocation2 + $0x1c8] sm:$0xff]
    %v708 = vld [vmem:[#allocation2 + $0x1d0] sm:$0xff]
    %v709 = vld [vmem:[#allocation2 + $0x1d8] sm:$0xf]
    %v710 = vld [vmem:[#allocation2 + $0x1dc] sm:$0xff]
    %v711 = vld [vmem:[#allocation2 + $0x1e4] sm:$0xff]
    %v712 = vld [vmem:[#allocation2 + $0x1ec] sm:$0xff]
    %v713 = vld [vmem:[#allocation2 + $0x1f4] sm:$0xf]
    %v714 = vld [vmem:[%s2] sm:$0xff]
    %v715 = vld [vmem:[%s2 + $0x8] sm:$0xff]
    %717 = vset.pattern.permute.xlu0 0
    %718 = vperm.xlu0 %717, %v714
    %v719 = vpop.permute.xlu0 %718
    %722 = vset.pattern.permute.xlu0 0
    %723 = vperm.xlu0 %722, %v715
    %v724 = vpop.permute.xlu0 %723
    %v728 = vunpack.c.l.b16 %v640
    %v729 = vunpack.c.h.b16 %v640
    %v730 = vunpack.c.l.b16 %v641
    %v731 = vunpack.c.h.b16 %v641
    %v732 = vpack.c.b16 %v730, %v728
    %v733 = vpack.c.b16 %v731, %v729
    %v807 = vunpack.c.l.b16 %v642
    %v808 = vunpack.c.h.b16 %v642
    %v809 = vunpack.c.l.b16 %v643
    %v810 = vunpack.c.h.b16 %v643
    %v811 = vunpack.c.l.b16 %v644
    %v812 = vunpack.c.h.b16 %v644
    %v813 = vunpack.c.l.b16 %v645
    %v814 = vunpack.c.l.b16 %v646
    %v815 = vunpack.c.h.b16 %v646
    %v816 = vunpack.c.l.b16 %v647
    %v817 = vunpack.c.h.b16 %v647
    %v818 = vunpack.c.l.b16 %v648
    %v819 = vunpack.c.h.b16 %v648
    %v820 = vunpack.c.l.b16 %v649
    %v821 = vunpack.c.l.b16 %v650
    %v822 = vunpack.c.h.b16 %v650
    %v823 = vunpack.c.l.b16 %v651
    %v824 = vunpack.c.h.b16 %v651
    %v825 = vunpack.c.l.b16 %v652
    %v826 = vunpack.c.h.b16 %v652
    %v827 = vunpack.c.l.b16 %v653
    %v828 = vunpack.c.l.b16 %v654
    %v829 = vunpack.c.h.b16 %v654
    %v830 = vunpack.c.l.b16 %v655
    %v831 = vunpack.c.h.b16 %v655
    %v832 = vunpack.c.l.b16 %v656
    %v833 = vunpack.c.h.b16 %v656
    %v834 = vunpack.c.l.b16 %v657
    %v835 = vunpack.c.l.b16 %v658
    %v836 = vunpack.c.h.b16 %v658
    %v837 = vunpack.c.l.b16 %v659
    %v838 = vunpack.c.h.b16 %v659
    %v839 = vunpack.c.l.b16 %v660
    %v840 = vunpack.c.h.b16 %v660
    %v841 = vunpack.c.l.b16 %v661
    %v842 = vunpack.c.l.b16 %v662
    %v843 = vunpack.c.h.b16 %v662
    %v844 = vunpack.c.l.b16 %v663
    %v845 = vunpack.c.h.b16 %v663
    %v846 = vunpack.c.l.b16 %v664
    %v847 = vunpack.c.h.b16 %v664
    %v848 = vunpack.c.l.b16 %v665
    %v849 = vunpack.c.l.b16 %v666
    %v850 = vunpack.c.h.b16 %v666
    %v851 = vunpack.c.l.b16 %v667
    %v852 = vunpack.c.h.b16 %v667
    %v853 = vunpack.c.l.b16 %v668
    %v854 = vunpack.c.h.b16 %v668
    %v855 = vunpack.c.l.b16 %v669
    %v856 = vunpack.c.l.b16 %v670
    %v857 = vunpack.c.h.b16 %v670
    %v858 = vunpack.c.l.b16 %v671
    %v859 = vunpack.c.h.b16 %v671
    %v860 = vunpack.c.l.b16 %v672
    %v861 = vunpack.c.h.b16 %v672
    %v862 = vunpack.c.l.b16 %v673
    %v863 = vunpack.c.l.b16 %v674
    %v864 = vunpack.c.h.b16 %v674
    %v865 = vunpack.c.l.b16 %v675
    %v866 = vunpack.c.h.b16 %v675
    %v867 = vunpack.c.l.b16 %v676
    %v868 = vunpack.c.h.b16 %v676
    %v869 = vunpack.c.l.b16 %v677
    %v870 = vunpack.c.l.b16 %v678
    %v871 = vunpack.c.h.b16 %v678
    %v872 = vunpack.c.l.b16 %v679
    %v873 = vunpack.c.h.b16 %v679
    %v874 = vunpack.c.l.b16 %v680
    %v875 = vunpack.c.h.b16 %v680
    %v876 = vunpack.c.l.b16 %v681
    %v877 = vunpack.c.l.b16 %v682
    %v878 = vunpack.c.h.b16 %v682
    %v879 = vunpack.c.l.b16 %v683
    %v880 = vunpack.c.h.b16 %v683
    %v881 = vunpack.c.l.b16 %v684
    %v882 = vunpack.c.h.b16 %v684
    %v883 = vunpack.c.l.b16 %v685
    %v884 = vunpack.c.l.b16 %v686
    %v885 = vunpack.c.h.b16 %v686
    %v886 = vunpack.c.l.b16 %v687
    %v887 = vunpack.c.h.b16 %v687
    %v888 = vunpack.c.l.b16 %v688
    %v889 = vunpack.c.h.b16 %v688
    %v890 = vunpack.c.l.b16 %v689
    %v891 = vunpack.c.l.b16 %v690
    %v892 = vunpack.c.h.b16 %v690
    %v893 = vunpack.c.l.b16 %v691
    %v894 = vunpack.c.h.b16 %v691
    %v895 = vunpack.c.l.b16 %v692
    %v896 = vunpack.c.h.b16 %v692
    %v897 = vunpack.c.l.b16 %v693
    %v898 = vunpack.c.l.b16 %v694
    %v899 = vunpack.c.h.b16 %v694
    %v900 = vunpack.c.l.b16 %v695
    %v901 = vunpack.c.h.b16 %v695
    %v902 = vunpack.c.l.b16 %v696
    %v903 = vunpack.c.h.b16 %v696
    %v904 = vunpack.c.l.b16 %v697
    %v905 = vunpack.c.l.b16 %v698
    %v906 = vunpack.c.h.b16 %v698
    %v907 = vunpack.c.l.b16 %v699
    %v908 = vunpack.c.h.b16 %v699
    %v909 = vunpack.c.l.b16 %v700
    %v910 = vunpack.c.h.b16 %v700
    %v911 = vunpack.c.l.b16 %v701
    %v912 = vunpack.c.l.b16 %v702
    %v913 = vunpack.c.h.b16 %v702
    %v914 = vunpack.c.l.b16 %v703
    %v915 = vunpack.c.h.b16 %v703
    %v916 = vunpack.c.l.b16 %v704
    %v917 = vunpack.c.h.b16 %v704
    %v918 = vunpack.c.l.b16 %v705
    %v919 = vunpack.c.l.b16 %v706
    %v920 = vunpack.c.h.b16 %v706
    %v921 = vunpack.c.l.b16 %v707
    %v922 = vunpack.c.h.b16 %v707
    %v923 = vunpack.c.l.b16 %v708
    %v924 = vunpack.c.h.b16 %v708
    %v925 = vunpack.c.l.b16 %v709
    %v926 = vunpack.c.l.b16 %v710
    %v927 = vunpack.c.h.b16 %v710
    %v928 = vunpack.c.l.b16 %v711
    %v929 = vunpack.c.h.b16 %v711
    %v930 = vunpack.c.l.b16 %v712
    %v931 = vunpack.c.h.b16 %v712
    %v932 = vunpack.c.l.b16 %v713
    %v933 = vpack.c.b16 %v814, %v807
    %v934 = vpack.c.b16 %v815, %v808
    %v935 = vpack.c.b16 %v816, %v809
    %v936 = vpack.c.b16 %v817, %v810
    %v937 = vpack.c.b16 %v818, %v811
    %v938 = vpack.c.b16 %v819, %v812
    %v939 = vpack.c.b16 %v820, %v813
    %v940 = vpack.c.b16 %v828, %v821
    %v941 = vpack.c.b16 %v829, %v822
    %v942 = vpack.c.b16 %v830, %v823
    %v943 = vpack.c.b16 %v831, %v824
    %v944 = vpack.c.b16 %v832, %v825
    %v945 = vpack.c.b16 %v833, %v826
    %v946 = vpack.c.b16 %v834, %v827
    %v947 = vpack.c.b16 %v842, %v835
    %v948 = vpack.c.b16 %v843, %v836
    %v949 = vpack.c.b16 %v844, %v837
    %v950 = vpack.c.b16 %v845, %v838
    %v951 = vpack.c.b16 %v846, %v839
    %v952 = vpack.c.b16 %v847, %v840
    %v953 = vpack.c.b16 %v848, %v841
    %v954 = vpack.c.b16 %v856, %v849
    %v955 = vpack.c.b16 %v857, %v850
    %v956 = vpack.c.b16 %v858, %v851
    %v957 = vpack.c.b16 %v859, %v852
    %v958 = vpack.c.b16 %v860, %v853
    %v959 = vpack.c.b16 %v861, %v854
    %v960 = vpack.c.b16 %v862, %v855
    %v961 = vpack.c.b16 %v870, %v863
    %v962 = vpack.c.b16 %v871, %v864
    %v963 = vpack.c.b16 %v872, %v865
    %v964 = vpack.c.b16 %v873, %v866
    %v965 = vpack.c.b16 %v874, %v867
    %v966 = vpack.c.b16 %v875, %v868
    %v967 = vpack.c.b16 %v876, %v869
    %v968 = vpack.c.b16 %v884, %v877
    %v969 = vpack.c.b16 %v885, %v878
    %v970 = vpack.c.b16 %v886, %v879
    %v971 = vpack.c.b16 %v887, %v880
    %v972 = vpack.c.b16 %v888, %v881
    %v973 = vpack.c.b16 %v889, %v882
    %v974 = vpack.c.b16 %v890, %v883
    %v975 = vpack.c.b16 %v898, %v891
    %v976 = vpack.c.b16 %v899, %v892
    %v977 = vpack.c.b16 %v900, %v893
    %v978 = vpack.c.b16 %v901, %v894
    %v979 = vpack.c.b16 %v902, %v895
    %v980 = vpack.c.b16 %v903, %v896
    %v981 = vpack.c.b16 %v904, %v897
    %v982 = vpack.c.b16 %v912, %v905
    %v983 = vpack.c.b16 %v913, %v906
    %v984 = vpack.c.b16 %v914, %v907
    %v985 = vpack.c.b16 %v915, %v908
    %v986 = vpack.c.b16 %v916, %v909
    %v987 = vpack.c.b16 %v917, %v910
    %v988 = vpack.c.b16 %v918, %v911
    %v989 = vpack.c.b16 %v926, %v919
    %v990 = vpack.c.b16 %v927, %v920
    %v991 = vpack.c.b16 %v928, %v921
    %v992 = vpack.c.b16 %v929, %v922
    %v993 = vpack.c.b16 %v930, %v923
    %v994 = vpack.c.b16 %v931, %v924
    %v995 = vpack.c.b16 %v932, %v925
    %vm1059 = vcmask 130048
    %v1061 = vsel %vm1059, %v733, 0
    %1063 = vmatpush.bf16.msra.mxu0 %v982
    %1064 = vmatpush.bf16.msra.mxu0 %v975
    %1065 = vmatpush.bf16.msra.mxu0 %v968
    %1066 = vmatpush.bf16.msra.mxu0 %v961
    %1067 = vmatpush.bf16.msra.mxu0 %v954
    %1068 = vmatpush.bf16.msra.mxu0 %v947
    %1069 = vmatpush.bf16.msra.mxu0 %v940
    %1070 = vmatpush.bf16.msra.mxu0 %v933
    %1071 = vmatmul.bf16.gmra.mxu0 %v732
    %v1072 = vpop.f32.mrf.mxu0
    %v1073 = vadd.f32 %v719, %v1072
    %v1074 = vpop.f32.mrf.mxu0
    %v1075 = vadd.f32 %v724, %v1074
    %1076 = vdwg.mxu0
    %1077 = vmatpush.bf16.msra.mxu0 0
    %1078 = vmatpush.bf16.msra.mxu0 0
    %1079 = vmatpush.bf16.msra.mxu0 0
    %1080 = vmatpush.bf16.msra.mxu0 0
    %1081 = vmatpush.bf16.msra.mxu0 0
    %1082 = vmatpush.bf16.msra.mxu0 0
    %1083 = vmatpush.bf16.msra.mxu0 0
    %1084 = vmatpush.bf16.msra.mxu0 %v989
    %1085 = vmatmul.bf16.gmra.mxu0 %v1061
    %v1086 = vpop.f32.mrf.mxu0
    %v1087 = vadd.f32 %v1073, %v1086
    %v1088 = vpop.f32.mrf.mxu0
    %v1089 = vadd.f32 %v1075, %v1088
    %1090 = vdwg.mxu0
    %1091 = vmatpush.bf16.msra.mxu0 %v983
    %1092 = vmatpush.bf16.msra.mxu0 %v976
    %1093 = vmatpush.bf16.msra.mxu0 %v969
    %1094 = vmatpush.bf16.msra.mxu0 %v962
    %1095 = vmatpush.bf16.msra.mxu0 %v955
    %1096 = vmatpush.bf16.msra.mxu0 %v948
    %1097 = vmatpush.bf16.msra.mxu0 %v941
    %1098 = vmatpush.bf16.msra.mxu0 %v934
    %1099 = vmatmul.bf16.gmra.mxu0 %v732
    %v1100 = vpop.f32.mrf.mxu0
    %v1101 = vadd.f32 %v719, %v1100
    %v1102 = vpop.f32.mrf.mxu0
    %v1103 = vadd.f32 %v724, %v1102
    %1104 = vdwg.mxu0
    %1105 = vmatpush.bf16.msra.mxu0 0
    %1106 = vmatpush.bf16.msra.mxu0 0
    %1107 = vmatpush.bf16.msra.mxu0 0
    %1108 = vmatpush.bf16.msra.mxu0 0
    %1109 = vmatpush.bf16.msra.mxu0 0
    %1110 = vmatpush.bf16.msra.mxu0 0
    %1111 = vmatpush.bf16.msra.mxu0 0
    %1112 = vmatpush.bf16.msra.mxu0 %v990
    %1113 = vmatmul.bf16.gmra.mxu0 %v1061
    %v1114 = vpop.f32.mrf.mxu0
    %v1115 = vadd.f32 %v1101, %v1114
    %v1116 = vpop.f32.mrf.mxu0
    %v1117 = vadd.f32 %v1103, %v1116
    %1118 = vdwg.mxu0
    %1119 = vmatpush.bf16.msra.mxu0 %v984
    %1120 = vmatpush.bf16.msra.mxu0 %v977
    %1121 = vmatpush.bf16.msra.mxu0 %v970
    %1122 = vmatpush.bf16.msra.mxu0 %v963
    %1123 = vmatpush.bf16.msra.mxu0 %v956
    %1124 = vmatpush.bf16.msra.mxu0 %v949
    %1125 = vmatpush.bf16.msra.mxu0 %v942
    %1126 = vmatpush.bf16.msra.mxu0 %v935
    %1127 = vmatmul.bf16.gmra.mxu0 %v732
    %v1128 = vpop.f32.mrf.mxu0
    %v1129 = vadd.f32 %v719, %v1128
    %v1130 = vpop.f32.mrf.mxu0
    %v1131 = vadd.f32 %v724, %v1130
    %1132 = vdwg.mxu0
    %1133 = vmatpush.bf16.msra.mxu0 0
    %1134 = vmatpush.bf16.msra.mxu0 0
    %1135 = vmatpush.bf16.msra.mxu0 0
    %1136 = vmatpush.bf16.msra.mxu0 0
    %1137 = vmatpush.bf16.msra.mxu0 0
    %1138 = vmatpush.bf16.msra.mxu0 0
    %1139 = vmatpush.bf16.msra.mxu0 0
    %1140 = vmatpush.bf16.msra.mxu0 %v991
    %1141 = vmatmul.bf16.gmra.mxu0 %v1061
    %v1142 = vpop.f32.mrf.mxu0
    %v1143 = vadd.f32 %v1129, %v1142
    %v1144 = vpop.f32.mrf.mxu0
    %v1145 = vadd.f32 %v1131, %v1144
    %1146 = vdwg.mxu0
    %1147 = vmatpush.bf16.msra.mxu0 %v985
    %1148 = vmatpush.bf16.msra.mxu0 %v978
    %1149 = vmatpush.bf16.msra.mxu0 %v971
    %1150 = vmatpush.bf16.msra.mxu0 %v964
    %1151 = vmatpush.bf16.msra.mxu0 %v957
    %1152 = vmatpush.bf16.msra.mxu0 %v950
    %1153 = vmatpush.bf16.msra.mxu0 %v943
    %1154 = vmatpush.bf16.msra.mxu0 %v936
    %1155 = vmatmul.bf16.gmra.mxu0 %v732
    %v1156 = vpop.f32.mrf.mxu0
    %v1157 = vadd.f32 %v719, %v1156
    %v1158 = vpop.f32.mrf.mxu0
    %v1159 = vadd.f32 %v724, %v1158
    %1160 = vdwg.mxu0
    %1161 = vmatpush.bf16.msra.mxu0 0
    %1162 = vmatpush.bf16.msra.mxu0 0
    %1163 = vmatpush.bf16.msra.mxu0 0
    %1164 = vmatpush.bf16.msra.mxu0 0
    %1165 = vmatpush.bf16.msra.mxu0 0
    %1166 = vmatpush.bf16.msra.mxu0 0
    %1167 = vmatpush.bf16.msra.mxu0 0
    %1168 = vmatpush.bf16.msra.mxu0 %v992
    %1169 = vmatmul.bf16.gmra.mxu0 %v1061
    %v1170 = vpop.f32.mrf.mxu0
    %v1171 = vadd.f32 %v1157, %v1170
    %v1172 = vpop.f32.mrf.mxu0
    %v1173 = vadd.f32 %v1159, %v1172
    %1174 = vdwg.mxu0
    %1175 = vmatpush.bf16.msra.mxu0 %v986
    %1176 = vmatpush.bf16.msra.mxu0 %v979
    %1177 = vmatpush.bf16.msra.mxu0 %v972
    %1178 = vmatpush.bf16.msra.mxu0 %v965
    %1179 = vmatpush.bf16.msra.mxu0 %v958
    %1180 = vmatpush.bf16.msra.mxu0 %v951
    %1181 = vmatpush.bf16.msra.mxu0 %v944
    %1182 = vmatpush.bf16.msra.mxu0 %v937
    %1183 = vmatmul.bf16.gmra.mxu0 %v732
    %v1184 = vpop.f32.mrf.mxu0
    %v1185 = vadd.f32 %v719, %v1184
    %v1186 = vpop.f32.mrf.mxu0
    %v1187 = vadd.f32 %v724, %v1186
    %1188 = vdwg.mxu0
    %1189 = vmatpush.bf16.msra.mxu0 0
    %1190 = vmatpush.bf16.msra.mxu0 0
    %1191 = vmatpush.bf16.msra.mxu0 0
    %1192 = vmatpush.bf16.msra.mxu0 0
    %1193 = vmatpush.bf16.msra.mxu0 0
    %1194 = vmatpush.bf16.msra.mxu0 0
    %1195 = vmatpush.bf16.msra.mxu0 0
    %1196 = vmatpush.bf16.msra.mxu0 %v993
    %1197 = vmatmul.bf16.gmra.mxu0 %v1061
    %v1198 = vpop.f32.mrf.mxu0
    %v1199 = vadd.f32 %v1185, %v1198
    %v1200 = vpop.f32.mrf.mxu0
    %v1201 = vadd.f32 %v1187, %v1200
    %1202 = vdwg.mxu0
    %1203 = vmatpush.bf16.msra.mxu0 %v987
    %1204 = vmatpush.bf16.msra.mxu0 %v980
    %1205 = vmatpush.bf16.msra.mxu0 %v973
    %1206 = vmatpush.bf16.msra.mxu0 %v966
    %1207 = vmatpush.bf16.msra.mxu0 %v959
    %1208 = vmatpush.bf16.msra.mxu0 %v952
    %1209 = vmatpush.bf16.msra.mxu0 %v945
    %1210 = vmatpush.bf16.msra.mxu0 %v938
    %1211 = vmatmul.bf16.gmra.mxu0 %v732
    %v1212 = vpop.f32.mrf.mxu0
    %v1213 = vadd.f32 %v719, %v1212
    %v1214 = vpop.f32.mrf.mxu0
    %v1215 = vadd.f32 %v724, %v1214
    %1216 = vdwg.mxu0
    %1217 = vmatpush.bf16.msra.mxu0 0
    %1218 = vmatpush.bf16.msra.mxu0 0
    %1219 = vmatpush.bf16.msra.mxu0 0
    %1220 = vmatpush.bf16.msra.mxu0 0
    %1221 = vmatpush.bf16.msra.mxu0 0
    %1222 = vmatpush.bf16.msra.mxu0 0
    %1223 = vmatpush.bf16.msra.mxu0 0
    %1224 = vmatpush.bf16.msra.mxu0 %v994
    %1225 = vmatmul.bf16.gmra.mxu0 %v1061
    %v1226 = vpop.f32.mrf.mxu0
    %v1227 = vadd.f32 %v1213, %v1226
    %v1228 = vpop.f32.mrf.mxu0
    %v1229 = vadd.f32 %v1215, %v1228
    %1230 = vdwg.mxu0
    %1231 = vmatpush.bf16.msra.mxu0 %v988
    %1232 = vmatpush.bf16.msra.mxu0 %v981
    %1233 = vmatpush.bf16.msra.mxu0 %v974
    %1234 = vmatpush.bf16.msra.mxu0 %v967
    %1235 = vmatpush.bf16.msra.mxu0 %v960
    %1236 = vmatpush.bf16.msra.mxu0 %v953
    %1237 = vmatpush.bf16.msra.mxu0 %v946
    %1238 = vmatpush.bf16.msra.mxu0 %v939
    %1239 = vmatmul.bf16.gmra.mxu0 %v732
    %v1240 = vpop.f32.mrf.mxu0
    %v1241 = vadd.f32 %v719, %v1240
    %v1242 = vpop.f32.mrf.mxu0
    %v1243 = vadd.f32 %v724, %v1242
    %1244 = vdwg.mxu0
    %1245 = vmatpush.bf16.msra.mxu0 0
    %1246 = vmatpush.bf16.msra.mxu0 0
    %1247 = vmatpush.bf16.msra.mxu0 0
    %1248 = vmatpush.bf16.msra.mxu0 0
    %1249 = vmatpush.bf16.msra.mxu0 0
    %1250 = vmatpush.bf16.msra.mxu0 0
    %1251 = vmatpush.bf16.msra.mxu0 0
    %1252 = vmatpush.bf16.msra.mxu0 %v995
    %1253 = vmatmul.bf16.gmra.mxu0 %v1061
    %v1254 = vpop.f32.mrf.mxu0
    %v1255 = vadd.f32 %v1241, %v1254
    %v1256 = vpop.f32.mrf.mxu0
    %v1257 = vadd.f32 %v1243, %v1256
    %1258 = vdwg.mxu0
    %v1259 = vmax.f32 %v1087, 0.0
    %v1260 = vmax.f32 %v1115, 0.0
    %v1261 = vmax.f32 %v1143, 0.0
    %v1262 = vmax.f32 %v1171, 0.0
    %v1263 = vmax.f32 %v1199, 0.0
    %v1264 = vmax.f32 %v1227, 0.0
    %v1265 = vmax.f32 %v1255, 0.0
    %v1266 = vmax.f32 %v1089, 0.0
    %v1267 = vmax.f32 %v1117, 0.0
    %v1268 = vmax.f32 %v1145, 0.0
    %v1269 = vmax.f32 %v1173, 0.0
    %v1270 = vmax.f32 %v1201, 0.0
    %v1271 = vmax.f32 %v1229, 0.0
    %v1272 = vmax.f32 %v1257, 0.0
    %v1273 = vld [vmem:[#allocation7] sm:$0xff]
    %v1275 = vperm.slane %v1273, 0
    %v1276 = vperm.slane %v1273, 1
    %v1277 = vperm.slane %v1273, 2
    %v1278 = vperm.slane %v1273, 3
    %v1279 = vperm.slane %v1273, 4
    %v1280 = vperm.slane %v1273, 5
    %v1281 = vperm.slane %v1273, 6
    %v1289 = vmul.f32 %v1259, %v1275
    %v1290 = vmul.f32 %v1260, %v1276
    %v1291 = vmul.f32 %v1261, %v1277
    %v1292 = vmul.f32 %v1262, %v1278
    %v1293 = vmul.f32 %v1263, %v1279
    %v1294 = vmul.f32 %v1264, %v1280
    %v1295 = vmul.f32 %v1265, %v1281
    %v1296 = vmul.f32 %v1266, %v1275
    %v1297 = vmul.f32 %v1267, %v1276
    %v1298 = vmul.f32 %v1268, %v1277
    %v1299 = vmul.f32 %v1269, %v1278
    %v1300 = vmul.f32 %v1270, %v1279
    %v1301 = vmul.f32 %v1271, %v1280
    %v1302 = vmul.f32 %v1272, %v1281
    %v1303 = vpack.c.bf16 %v1290, %v1289
    %v1304 = vpack.c.bf16 %v1292, %v1291
    %v1305 = vpack.c.bf16 %v1294, %v1293
    %v1306 = vpack.c.bf16 %v1295, %v1295
    %v1307 = vpack.c.bf16 %v1297, %v1296
    %v1308 = vpack.c.bf16 %v1299, %v1298
    %v1309 = vpack.c.bf16 %v1301, %v1300
    %v1310 = vpack.c.bf16 %v1302, %v1302
    %1311 = vst [vmem:[#allocation3] sm:$0xff] %v1303
    %1312 = vst [vmem:[#allocation3 + $0x8] sm:$0xff] %v1304
    %1313 = vst [vmem:[#allocation3 + $0x10] sm:$0xff] %v1305
    %1314 = vst [vmem:[#allocation3 + $0x18] sm:$0xf] %v1306
    %1315 = vst [vmem:[#allocation3 + $0x1c] sm:$0xff] %v1307
    %1316 = vst [vmem:[#allocation3 + $0x24] sm:$0xff] %v1308
    %1317 = vst [vmem:[#allocation3 + $0x2c] sm:$0xff] %v1309
    %1318 = vst [vmem:[#allocation3 + $0x34] sm:$0xf] %v1310
    %v1319 = vld [vmem:[#allocation3] sm:$0xff]
    %v1320 = vld [vmem:[#allocation3 + $0x8] sm:$0xff]
    %v1321 = vld [vmem:[#allocation3 + $0x10] sm:$0xff]
    %v1322 = vld [vmem:[#allocation3 + $0x1c] sm:$0xff]
    %v1323 = vld [vmem:[#allocation3 + $0x24] sm:$0xff]
    %v1324 = vld [vmem:[#allocation3 + $0x2c] sm:$0xff]
    %1325 = vst [vmem:[#allocation2] sm:$0xff] %v1319
    %1326 = vst [vmem:[#allocation2 + $0x8] sm:$0xff] %v1320
    %1327 = vst [vmem:[#allocation2 + $0x10] sm:$0xff] %v1321
    %1328 = vst [vmem:[#allocation2 + $0x1c] sm:$0xff] %v1322
    %1329 = vst [vmem:[#allocation2 + $0x24] sm:$0xff] %v1323
    %1330 = vst [vmem:[#allocation2 + $0x2c] sm:$0xff] %v1324
    %v1331 = vld [vmem:[#allocation3] sm:$0xff]
    %v1332 = vld [vmem:[#allocation3 + $0x8] sm:$0xff]
    %v1333 = vld [vmem:[#allocation3 + $0x10] sm:$0xff]
    %v1334 = vld [vmem:[#allocation3 + $0x18] sm:$0xf]
    %v1335 = vld [vmem:[#allocation3 + $0x1c] sm:$0xff]
    %v1336 = vld [vmem:[#allocation3 + $0x24] sm:$0xff]
    %v1337 = vld [vmem:[#allocation3 + $0x2c] sm:$0xff]
    %v1338 = vld [vmem:[#allocation3 + $0x34] sm:$0xf]
    %1347 = vrot.lane.b32.xlu0 %v1331, 127
    %v1348 = vpop.permute.xlu0 %1347
    %1349 = vrot.lane.b32.xlu0 %v1332, 127
    %v1350 = vpop.permute.xlu0 %1349
    %1351 = vrot.lane.b32.xlu0 %v1333, 127
    %v1352 = vpop.permute.xlu0 %1351
    %1353 = vrot.lane.b32.xlu0 %v1334, 127
    %v1354 = vpop.permute.xlu0 %1353
    %1355 = vrot.lane.b32.xlu0 %v1335, 127
    %v1356 = vpop.permute.xlu0 %1355
    %1357 = vrot.lane.b32.xlu0 %v1336, 127
    %v1358 = vpop.permute.xlu0 %1357
    %1359 = vrot.lane.b32.xlu0 %v1337, 127
    %v1360 = vpop.permute.xlu0 %1359
    %1361 = vrot.lane.b32.xlu0 %v1338, 127
    %v1362 = vpop.permute.xlu0 %1361
    %v1363 = vrot.slane %v1348, 4
    %v1364 = vrot.slane %v1350, 4
    %v1365 = vrot.slane %v1352, 4
    %v1366 = vrot.slane %v1354, 4
    %v1367 = vrot.slane %v1356, 4
    %v1368 = vrot.slane %v1358, 4
    %v1369 = vrot.slane %v1360, 4
    %v1370 = vrot.slane %v1362, 4
    %v1371 = vsel %vm111, %v1363, %v1364
    %v1372 = vsel %vm113, %v1348, %v1371
    %v1373 = vsel %vm111, %v1364, %v1365
    %v1374 = vsel %vm113, %v1350, %v1373
    %v1375 = vsel %vm111, %v1365, %v1366
    %v1376 = vsel %vm113, %v1352, %v1375
    %v1377 = vsel %vm111, %v1367, %v1368
    %v1378 = vsel %vm113, %v1356, %v1377
    %v1379 = vsel %vm111, %v1368, %v1369
    %v1380 = vsel %vm113, %v1358, %v1379
    %v1381 = vsel %vm111, %v1369, %v1370
    %v1382 = vsel %vm113, %v1360, %v1381
    %1389 = vst [vmem:[#allocation2 + $0x38] sm:$0xff] %v1372
    %1390 = vst [vmem:[#allocation2 + $0x40] sm:$0xff] %v1374
    %1391 = vst [vmem:[#allocation2 + $0x48] sm:$0xff] %v1376
    %1392 = vst [vmem:[#allocation2 + $0x54] sm:$0xff] %v1378
    %1393 = vst [vmem:[#allocation2 + $0x5c] sm:$0xff] %v1380
    %1394 = vst [vmem:[#allocation2 + $0x64] sm:$0xff] %v1382
    %v1395 = vld [vmem:[#allocation3] sm:$0xff]
    %v1396 = vld [vmem:[#allocation3 + $0x8] sm:$0xff]
    %v1397 = vld [vmem:[#allocation3 + $0x10] sm:$0xff]
    %v1398 = vld [vmem:[#allocation3 + $0x18] sm:$0xf]
    %v1399 = vld [vmem:[#allocation3 + $0x1c] sm:$0xff]
    %v1400 = vld [vmem:[#allocation3 + $0x24] sm:$0xff]
    %v1401 = vld [vmem:[#allocation3 + $0x2c] sm:$0xff]
    %v1402 = vld [vmem:[#allocation3 + $0x34] sm:$0xf]
    %1411 = vrot.lane.b32.xlu0 %v1395, 126
    %v1412 = vpop.permute.xlu0 %1411
    %1413 = vrot.lane.b32.xlu0 %v1396, 126
    %v1414 = vpop.permute.xlu0 %1413
    %1415 = vrot.lane.b32.xlu0 %v1397, 126
    %v1416 = vpop.permute.xlu0 %1415
    %1417 = vrot.lane.b32.xlu0 %v1398, 126
    %v1418 = vpop.permute.xlu0 %1417
    %1419 = vrot.lane.b32.xlu0 %v1399, 126
    %v1420 = vpop.permute.xlu0 %1419
    %1421 = vrot.lane.b32.xlu0 %v1400, 126
    %v1422 = vpop.permute.xlu0 %1421
    %1423 = vrot.lane.b32.xlu0 %v1401, 126
    %v1424 = vpop.permute.xlu0 %1423
    %1425 = vrot.lane.b32.xlu0 %v1402, 126
    %v1426 = vpop.permute.xlu0 %1425
    %v1427 = vrot.slane %v1412, 4
    %v1428 = vrot.slane %v1414, 4
    %v1429 = vrot.slane %v1416, 4
    %v1430 = vrot.slane %v1418, 4
    %v1431 = vrot.slane %v1420, 4
    %v1432 = vrot.slane %v1422, 4
    %v1433 = vrot.slane %v1424, 4
    %v1434 = vrot.slane %v1426, 4
    %v1435 = vsel %vm111, %v1427, %v1428
    %v1436 = vsel %vm184, %v1412, %v1435
    %v1437 = vsel %vm111, %v1428, %v1429
    %v1438 = vsel %vm184, %v1414, %v1437
    %v1439 = vsel %vm111, %v1429, %v1430
    %v1440 = vsel %vm184, %v1416, %v1439
    %v1441 = vsel %vm111, %v1431, %v1432
    %v1442 = vsel %vm184, %v1420, %v1441
    %v1443 = vsel %vm111, %v1432, %v1433
    %v1444 = vsel %vm184, %v1422, %v1443
    %v1445 = vsel %vm111, %v1433, %v1434
    %v1446 = vsel %vm184, %v1424, %v1445
    %1453 = vst [vmem:[#allocation2 + $0x70] sm:$0xff] %v1436
    %1454 = vst [vmem:[#allocation2 + $0x78] sm:$0xff] %v1438
    %1455 = vst [vmem:[#allocation2 + $0x80] sm:$0xff] %v1440
    %1456 = vst [vmem:[#allocation2 + $0x8c] sm:$0xff] %v1442
    %1457 = vst [vmem:[#allocation2 + $0x94] sm:$0xff] %v1444
    %1458 = vst [vmem:[#allocation2 + $0x9c] sm:$0xff] %v1446
    %v1459 = vld [vmem:[#allocation3] sm:$0xff]
    %v1460 = vld [vmem:[#allocation3 + $0x8] sm:$0xff]
    %v1461 = vld [vmem:[#allocation3 + $0x10] sm:$0xff]
    %v1462 = vld [vmem:[#allocation3 + $0x18] sm:$0xf]
    %v1463 = vld [vmem:[#allocation3 + $0x1c] sm:$0xff]
    %v1464 = vld [vmem:[#allocation3 + $0x24] sm:$0xff]
    %v1465 = vld [vmem:[#allocation3 + $0x2c] sm:$0xff]
    %v1466 = vld [vmem:[#allocation3 + $0x34] sm:$0xf]
    %1475 = vrot.lane.b32.xlu0 %v1459, 110
    %v1476 = vpop.permute.xlu0 %1475
    %1477 = vrot.lane.b32.xlu0 %v1460, 110
    %v1478 = vpop.permute.xlu0 %1477
    %1479 = vrot.lane.b32.xlu0 %v1461, 110
    %v1480 = vpop.permute.xlu0 %1479
    %1481 = vrot.lane.b32.xlu0 %v1462, 110
    %v1482 = vpop.permute.xlu0 %1481
    %1483 = vrot.lane.b32.xlu0 %v1463, 110
    %v1484 = vpop.permute.xlu0 %1483
    %1485 = vrot.lane.b32.xlu0 %v1464, 110
    %v1486 = vpop.permute.xlu0 %1485
    %1487 = vrot.lane.b32.xlu0 %v1465, 110
    %v1488 = vpop.permute.xlu0 %1487
    %1489 = vrot.lane.b32.xlu0 %v1466, 110
    %v1490 = vpop.permute.xlu0 %1489
    %v1491 = vrot.slane %v1476, 4
    %v1492 = vrot.slane %v1478, 4
    %v1493 = vrot.slane %v1480, 4
    %v1494 = vrot.slane %v1482, 4
    %v1495 = vrot.slane %v1484, 4
    %v1496 = vrot.slane %v1486, 4
    %v1497 = vrot.slane %v1488, 4
    %v1498 = vrot.slane %v1490, 4
    %v1499 = vsel %vm111, %v1491, %v1492
    %v1500 = vsel %vm255, %v1476, %v1499
    %v1501 = vsel %vm111, %v1492, %v1493
    %v1502 = vsel %vm255, %v1478, %v1501
    %v1503 = vsel %vm111, %v1493, %v1494
    %v1504 = vsel %vm255, %v1480, %v1503
    %v1505 = vsel %vm111, %v1495, %v1496
    %v1506 = vsel %vm255, %v1484, %v1505
    %v1507 = vsel %vm111, %v1496, %v1497
    %v1508 = vsel %vm255, %v1486, %v1507
    %v1509 = vsel %vm111, %v1497, %v1498
    %v1510 = vsel %vm255, %v1488, %v1509
    %1517 = vst [vmem:[#allocation2 + $0xa8] sm:$0xff] %v1500
    %1518 = vst [vmem:[#allocation2 + $0xb0] sm:$0xff] %v1502
    %1519 = vst [vmem:[#allocation2 + $0xb8] sm:$0xff] %v1504
    %1520 = vst [vmem:[#allocation2 + $0xc4] sm:$0xff] %v1506
    %1521 = vst [vmem:[#allocation2 + $0xcc] sm:$0xff] %v1508
    %1522 = vst [vmem:[#allocation2 + $0xd4] sm:$0xff] %v1510
    %v1523 = vld [vmem:[#allocation3] sm:$0xff]
    %v1524 = vld [vmem:[#allocation3 + $0x8] sm:$0xff]
    %v1525 = vld [vmem:[#allocation3 + $0x10] sm:$0xff]
    %v1526 = vld [vmem:[#allocation3 + $0x18] sm:$0xf]
    %v1527 = vld [vmem:[#allocation3 + $0x1c] sm:$0xff]
    %v1528 = vld [vmem:[#allocation3 + $0x24] sm:$0xff]
    %v1529 = vld [vmem:[#allocation3 + $0x2c] sm:$0xff]
    %v1530 = vld [vmem:[#allocation3 + $0x34] sm:$0xf]
    %1539 = vrot.lane.b32.xlu0 %v1523, 109
    %v1540 = vpop.permute.xlu0 %1539
    %1541 = vrot.lane.b32.xlu0 %v1524, 109
    %v1542 = vpop.permute.xlu0 %1541
    %1543 = vrot.lane.b32.xlu0 %v1525, 109
    %v1544 = vpop.permute.xlu0 %1543
    %1545 = vrot.lane.b32.xlu0 %v1526, 109
    %v1546 = vpop.permute.xlu0 %1545
    %1547 = vrot.lane.b32.xlu0 %v1527, 109
    %v1548 = vpop.permute.xlu0 %1547
    %1549 = vrot.lane.b32.xlu0 %v1528, 109
    %v1550 = vpop.permute.xlu0 %1549
    %1551 = vrot.lane.b32.xlu0 %v1529, 109
    %v1552 = vpop.permute.xlu0 %1551
    %1553 = vrot.lane.b32.xlu0 %v1530, 109
    %v1554 = vpop.permute.xlu0 %1553
    %v1555 = vrot.slane %v1540, 4
    %v1556 = vrot.slane %v1542, 4
    %v1557 = vrot.slane %v1544, 4
    %v1558 = vrot.slane %v1546, 4
    %v1559 = vrot.slane %v1548, 4
    %v1560 = vrot.slane %v1550, 4
    %v1561 = vrot.slane %v1552, 4
    %v1562 = vrot.slane %v1554, 4
    %v1563 = vsel %vm111, %v1555, %v1556
    %v1564 = vsel %vm326, %v1540, %v1563
    %v1565 = vsel %vm111, %v1556, %v1557
    %v1566 = vsel %vm326, %v1542, %v1565
    %v1567 = vsel %vm111, %v1557, %v1558
    %v1568 = vsel %vm326, %v1544, %v1567
    %v1569 = vsel %vm111, %v1559, %v1560
    %v1570 = vsel %vm326, %v1548, %v1569
    %v1571 = vsel %vm111, %v1560, %v1561
    %v1572 = vsel %vm326, %v1550, %v1571
    %v1573 = vsel %vm111, %v1561, %v1562
    %v1574 = vsel %vm326, %v1552, %v1573
    %1581 = vst [vmem:[#allocation2 + $0xe0] sm:$0xff] %v1564
    %1582 = vst [vmem:[#allocation2 + $0xe8] sm:$0xff] %v1566
    %1583 = vst [vmem:[#allocation2 + $0xf0] sm:$0xff] %v1568
    %1584 = vst [vmem:[#allocation2 + $0xfc] sm:$0xff] %v1570
    %1585 = vst [vmem:[#allocation2 + $0x104] sm:$0xff] %v1572
    %1586 = vst [vmem:[#allocation2 + $0x10c] sm:$0xff] %v1574
    %v1587 = vld [vmem:[#allocation3] sm:$0xff]
    %v1588 = vld [vmem:[#allocation3 + $0x8] sm:$0xff]
    %v1589 = vld [vmem:[#allocation3 + $0x10] sm:$0xff]
    %v1590 = vld [vmem:[#allocation3 + $0x18] sm:$0xf]
    %v1591 = vld [vmem:[#allocation3 + $0x1c] sm:$0xff]
    %v1592 = vld [vmem:[#allocation3 + $0x24] sm:$0xff]
    %v1593 = vld [vmem:[#allocation3 + $0x2c] sm:$0xff]
    %v1594 = vld [vmem:[#allocation3 + $0x34] sm:$0xf]
    %1603 = vrot.lane.b32.xlu0 %v1587, 108
    %v1604 = vpop.permute.xlu0 %1603
    %1605 = vrot.lane.b32.xlu0 %v1588, 108
    %v1606 = vpop.permute.xlu0 %1605
    %1607 = vrot.lane.b32.xlu0 %v1589, 108
    %v1608 = vpop.permute.xlu0 %1607
    %1609 = vrot.lane.b32.xlu0 %v1590, 108
    %v1610 = vpop.permute.xlu0 %1609
    %1611 = vrot.lane.b32.xlu0 %v1591, 108
    %v1612 = vpop.permute.xlu0 %1611
    %1613 = vrot.lane.b32.xlu0 %v1592, 108
    %v1614 = vpop.permute.xlu0 %1613
    %1615 = vrot.lane.b32.xlu0 %v1593, 108
    %v1616 = vpop.permute.xlu0 %1615
    %1617 = vrot.lane.b32.xlu0 %v1594, 108
    %v1618 = vpop.permute.xlu0 %1617
    %v1619 = vrot.slane %v1604, 4
    %v1620 = vrot.slane %v1606, 4
    %v1621 = vrot.slane %v1608, 4
    %v1622 = vrot.slane %v1610, 4
    %v1623 = vrot.slane %v1612, 4
    %v1624 = vrot.slane %v1614, 4
    %v1625 = vrot.slane %v1616, 4
    %v1626 = vrot.slane %v1618, 4
    %v1627 = vsel %vm111, %v1619, %v1620
    %v1628 = vsel %vm397, %v1604, %v1627
    %v1629 = vsel %vm111, %v1620, %v1621
    %v1630 = vsel %vm397, %v1606, %v1629
    %v1631 = vsel %vm111, %v1621, %v1622
    %v1632 = vsel %vm397, %v1608, %v1631
    %v1633 = vsel %vm111, %v1623, %v1624
    %v1634 = vsel %vm397, %v1612, %v1633
    %v1635 = vsel %vm111, %v1624, %v1625
    %v1636 = vsel %vm397, %v1614, %v1635
    %v1637 = vsel %vm111, %v1625, %v1626
    %v1638 = vsel %vm397, %v1616, %v1637
    %1645 = vst [vmem:[#allocation2 + $0x118] sm:$0xff] %v1628
    %1646 = vst [vmem:[#allocation2 + $0x120] sm:$0xff] %v1630
    %1647 = vst [vmem:[#allocation2 + $0x128] sm:$0xff] %v1632
    %1648 = vst [vmem:[#allocation2 + $0x134] sm:$0xff] %v1634
    %1649 = vst [vmem:[#allocation2 + $0x13c] sm:$0xff] %v1636
    %1650 = vst [vmem:[#allocation2 + $0x144] sm:$0xff] %v1638
    %v1651 = vld [vmem:[#allocation3] sm:$0xff]
    %v1652 = vld [vmem:[#allocation3 + $0x8] sm:$0xff]
    %v1653 = vld [vmem:[#allocation3 + $0x10] sm:$0xff]
    %v1654 = vld [vmem:[#allocation3 + $0x18] sm:$0xf]
    %v1655 = vld [vmem:[#allocation3 + $0x1c] sm:$0xff]
    %v1656 = vld [vmem:[#allocation3 + $0x24] sm:$0xff]
    %v1657 = vld [vmem:[#allocation3 + $0x2c] sm:$0xff]
    %v1658 = vld [vmem:[#allocation3 + $0x34] sm:$0xf]
    %1667 = vrot.lane.b32.xlu0 %v1651, 92
    %v1668 = vpop.permute.xlu0 %1667
    %1669 = vrot.lane.b32.xlu0 %v1652, 92
    %v1670 = vpop.permute.xlu0 %1669
    %1671 = vrot.lane.b32.xlu0 %v1653, 92
    %v1672 = vpop.permute.xlu0 %1671
    %1673 = vrot.lane.b32.xlu0 %v1654, 92
    %v1674 = vpop.permute.xlu0 %1673
    %1675 = vrot.lane.b32.xlu0 %v1655, 92
    %v1676 = vpop.permute.xlu0 %1675
    %1677 = vrot.lane.b32.xlu0 %v1656, 92
    %v1678 = vpop.permute.xlu0 %1677
    %1679 = vrot.lane.b32.xlu0 %v1657, 92
    %v1680 = vpop.permute.xlu0 %1679
    %1681 = vrot.lane.b32.xlu0 %v1658, 92
    %v1682 = vpop.permute.xlu0 %1681
    %v1683 = vrot.slane %v1668, 4
    %v1684 = vrot.slane %v1670, 4
    %v1685 = vrot.slane %v1672, 4
    %v1686 = vrot.slane %v1674, 4
    %v1687 = vrot.slane %v1676, 4
    %v1688 = vrot.slane %v1678, 4
    %v1689 = vrot.slane %v1680, 4
    %v1690 = vrot.slane %v1682, 4
    %v1691 = vsel %vm111, %v1683, %v1684
    %v1692 = vsel %vm468, %v1668, %v1691
    %v1693 = vsel %vm111, %v1684, %v1685
    %v1694 = vsel %vm468, %v1670, %v1693
    %v1695 = vsel %vm111, %v1685, %v1686
    %v1696 = vsel %vm468, %v1672, %v1695
    %v1697 = vsel %vm111, %v1687, %v1688
    %v1698 = vsel %vm468, %v1676, %v1697
    %v1699 = vsel %vm111, %v1688, %v1689
    %v1700 = vsel %vm468, %v1678, %v1699
    %v1701 = vsel %vm111, %v1689, %v1690
    %v1702 = vsel %vm468, %v1680, %v1701
    %1709 = vst [vmem:[#allocation2 + $0x150] sm:$0xff] %v1692
    %1710 = vst [vmem:[#allocation2 + $0x158] sm:$0xff] %v1694
    %1711 = vst [vmem:[#allocation2 + $0x160] sm:$0xff] %v1696
    %1712 = vst [vmem:[#allocation2 + $0x16c] sm:$0xff] %v1698
    %1713 = vst [vmem:[#allocation2 + $0x174] sm:$0xff] %v1700
    %1714 = vst [vmem:[#allocation2 + $0x17c] sm:$0xff] %v1702
    %v1715 = vld [vmem:[#allocation3] sm:$0xff]
    %v1716 = vld [vmem:[#allocation3 + $0x8] sm:$0xff]
    %v1717 = vld [vmem:[#allocation3 + $0x10] sm:$0xff]
    %v1718 = vld [vmem:[#allocation3 + $0x18] sm:$0xf]
    %v1719 = vld [vmem:[#allocation3 + $0x1c] sm:$0xff]
    %v1720 = vld [vmem:[#allocation3 + $0x24] sm:$0xff]
    %v1721 = vld [vmem:[#allocation3 + $0x2c] sm:$0xff]
    %v1722 = vld [vmem:[#allocation3 + $0x34] sm:$0xf]
    %1731 = vrot.lane.b32.xlu0 %v1715, 91
    %v1732 = vpop.permute.xlu0 %1731
    %1733 = vrot.lane.b32.xlu0 %v1716, 91
    %v1734 = vpop.permute.xlu0 %1733
    %1735 = vrot.lane.b32.xlu0 %v1717, 91
    %v1736 = vpop.permute.xlu0 %1735
    %1737 = vrot.lane.b32.xlu0 %v1718, 91
    %v1738 = vpop.permute.xlu0 %1737
    %1739 = vrot.lane.b32.xlu0 %v1719, 91
    %v1740 = vpop.permute.xlu0 %1739
    %1741 = vrot.lane.b32.xlu0 %v1720, 91
    %v1742 = vpop.permute.xlu0 %1741
    %1743 = vrot.lane.b32.xlu0 %v1721, 91
    %v1744 = vpop.permute.xlu0 %1743
    %1745 = vrot.lane.b32.xlu0 %v1722, 91
    %v1746 = vpop.permute.xlu0 %1745
    %v1747 = vrot.slane %v1732, 4
    %v1748 = vrot.slane %v1734, 4
    %v1749 = vrot.slane %v1736, 4
    %v1750 = vrot.slane %v1738, 4
    %v1751 = vrot.slane %v1740, 4
    %v1752 = vrot.slane %v1742, 4
    %v1753 = vrot.slane %v1744, 4
    %v1754 = vrot.slane %v1746, 4
    %v1755 = vsel %vm111, %v1747, %v1748
    %v1756 = vsel %vm539, %v1732, %v1755
    %v1757 = vsel %vm111, %v1748, %v1749
    %v1758 = vsel %vm539, %v1734, %v1757
    %v1759 = vsel %vm111, %v1749, %v1750
    %v1760 = vsel %vm539, %v1736, %v1759
    %v1761 = vsel %vm111, %v1751, %v1752
    %v1762 = vsel %vm539, %v1740, %v1761
    %v1763 = vsel %vm111, %v1752, %v1753
    %v1764 = vsel %vm539, %v1742, %v1763
    %v1765 = vsel %vm111, %v1753, %v1754
    %v1766 = vsel %vm539, %v1744, %v1765
    %1773 = vst [vmem:[#allocation2 + $0x188] sm:$0xff] %v1756
    %1774 = vst [vmem:[#allocation2 + $0x190] sm:$0xff] %v1758
    %1775 = vst [vmem:[#allocation2 + $0x198] sm:$0xff] %v1760
    %1776 = vst [vmem:[#allocation2 + $0x1a4] sm:$0xff] %v1762
    %1777 = vst [vmem:[#allocation2 + $0x1ac] sm:$0xff] %v1764
    %1778 = vst [vmem:[#allocation2 + $0x1b4] sm:$0xff] %v1766
    %v1779 = vld [vmem:[#allocation3] sm:$0xff]
    %v1780 = vld [vmem:[#allocation3 + $0x8] sm:$0xff]
    %v1781 = vld [vmem:[#allocation3 + $0x10] sm:$0xff]
    %v1782 = vld [vmem:[#allocation3 + $0x18] sm:$0xf]
    %v1783 = vld [vmem:[#allocation3 + $0x1c] sm:$0xff]
    %v1784 = vld [vmem:[#allocation3 + $0x24] sm:$0xff]
    %v1785 = vld [vmem:[#allocation3 + $0x2c] sm:$0xff]
    %v1786 = vld [vmem:[#allocation3 + $0x34] sm:$0xf]
    %1795 = vrot.lane.b32.xlu0 %v1779, 90
    %v1796 = vpop.permute.xlu0 %1795
    %1797 = vrot.lane.b32.xlu0 %v1780, 90
    %v1798 = vpop.permute.xlu0 %1797
    %1799 = vrot.lane.b32.xlu0 %v1781, 90
    %v1800 = vpop.permute.xlu0 %1799
    %1801 = vrot.lane.b32.xlu0 %v1782, 90
    %v1802 = vpop.permute.xlu0 %1801
    %1803 = vrot.lane.b32.xlu0 %v1783, 90
    %v1804 = vpop.permute.xlu0 %1803
    %1805 = vrot.lane.b32.xlu0 %v1784, 90
    %v1806 = vpop.permute.xlu0 %1805
    %1807 = vrot.lane.b32.xlu0 %v1785, 90
    %v1808 = vpop.permute.xlu0 %1807
    %1809 = vrot.lane.b32.xlu0 %v1786, 90
    %v1810 = vpop.permute.xlu0 %1809
    %v1811 = vrot.slane %v1796, 4
    %v1812 = vrot.slane %v1798, 4
    %v1813 = vrot.slane %v1800, 4
    %v1814 = vrot.slane %v1802, 4
    %v1815 = vrot.slane %v1804, 4
    %v1816 = vrot.slane %v1806, 4
    %v1817 = vrot.slane %v1808, 4
    %v1818 = vrot.slane %v1810, 4
    %v1819 = vsel %vm111, %v1811, %v1812
    %v1820 = vsel %vm610, %v1796, %v1819
    %v1821 = vsel %vm111, %v1812, %v1813
    %v1822 = vsel %vm610, %v1798, %v1821
    %v1823 = vsel %vm111, %v1813, %v1814
    %v1824 = vsel %vm610, %v1800, %v1823
    %v1825 = vsel %vm111, %v1815, %v1816
    %v1826 = vsel %vm610, %v1804, %v1825
    %v1827 = vsel %vm111, %v1816, %v1817
    %v1828 = vsel %vm610, %v1806, %v1827
    %v1829 = vsel %vm111, %v1817, %v1818
    %v1830 = vsel %vm610, %v1808, %v1829
    %1837 = vst [vmem:[#allocation2 + $0x1c0] sm:$0xff] %v1820
    %1838 = vst [vmem:[#allocation2 + $0x1c8] sm:$0xff] %v1822
    %1839 = vst [vmem:[#allocation2 + $0x1d0] sm:$0xff] %v1824
    %1840 = vst [vmem:[#allocation2 + $0x1dc] sm:$0xff] %v1826
    %1841 = vst [vmem:[#allocation2 + $0x1e4] sm:$0xff] %v1828
    %1842 = vst [vmem:[#allocation2 + $0x1ec] sm:$0xff] %v1830
    %v1843 = vld [vmem:[%s3] sm:$0xff]
    %v1844 = vld [vmem:[%s3 + $0x8] sm:$0xff]
    %v1845 = vld [vmem:[#allocation2] sm:$0xff]
    %v1846 = vld [vmem:[#allocation2 + $0x8] sm:$0xff]
    %v1847 = vld [vmem:[#allocation2 + $0x10] sm:$0xff]
    %v1848 = vld [vmem:[#allocation2 + $0x1c] sm:$0xff]
    %v1849 = vld [vmem:[#allocation2 + $0x24] sm:$0xff]
    %v1850 = vld [vmem:[#allocation2 + $0x2c] sm:$0xff]
    %v1851 = vld [vmem:[#allocation2 + $0x38] sm:$0xff]
    %v1852 = vld [vmem:[#allocation2 + $0x40] sm:$0xff]
    %v1853 = vld [vmem:[#allocation2 + $0x48] sm:$0xff]
    %v1854 = vld [vmem:[#allocation2 + $0x54] sm:$0xff]
    %v1855 = vld [vmem:[#allocation2 + $0x5c] sm:$0xff]
    %v1856 = vld [vmem:[#allocation2 + $0x64] sm:$0xff]
    %v1857 = vld [vmem:[#allocation2 + $0x70] sm:$0xff]
    %v1858 = vld [vmem:[#allocation2 + $0x78] sm:$0xff]
    %v1859 = vld [vmem:[#allocation2 + $0x80] sm:$0xff]
    %v1860 = vld [vmem:[#allocation2 + $0x8c] sm:$0xff]
    %v1861 = vld [vmem:[#allocation2 + $0x94] sm:$0xff]
    %v1862 = vld [vmem:[#allocation2 + $0x9c] sm:$0xff]
    %v1863 = vld [vmem:[#allocation2 + $0xa8] sm:$0xff]
    %v1864 = vld [vmem:[#allocation2 + $0xb0] sm:$0xff]
    %v1865 = vld [vmem:[#allocation2 + $0xb8] sm:$0xff]
    %v1866 = vld [vmem:[#allocation2 + $0xc4] sm:$0xff]
    %v1867 = vld [vmem:[#allocation2 + $0xcc] sm:$0xff]
    %v1868 = vld [vmem:[#allocation2 + $0xd4] sm:$0xff]
    %v1869 = vld [vmem:[#allocation2 + $0xe0] sm:$0xff]
    %v1870 = vld [vmem:[#allocation2 + $0xe8] sm:$0xff]
    %v1871 = vld [vmem:[#allocation2 + $0xf0] sm:$0xff]
    %v1872 = vld [vmem:[#allocation2 + $0xfc] sm:$0xff]
    %v1873 = vld [vmem:[#allocation2 + $0x104] sm:$0xff]
    %v1874 = vld [vmem:[#allocation2 + $0x10c] sm:$0xff]
    %v1875 = vld [vmem:[#allocation2 + $0x118] sm:$0xff]
    %v1876 = vld [vmem:[#allocation2 + $0x120] sm:$0xff]
    %v1877 = vld [vmem:[#allocation2 + $0x128] sm:$0xff]
    %v1878 = vld [vmem:[#allocation2 + $0x134] sm:$0xff]
    %v1879 = vld [vmem:[#allocation2 + $0x13c] sm:$0xff]
    %v1880 = vld [vmem:[#allocation2 + $0x144] sm:$0xff]
    %v1881 = vld [vmem:[#allocation2 + $0x150] sm:$0xff]
    %v1882 = vld [vmem:[#allocation2 + $0x158] sm:$0xff]
    %v1883 = vld [vmem:[#allocation2 + $0x160] sm:$0xff]
    %v1884 = vld [vmem:[#allocation2 + $0x16c] sm:$0xff]
    %v1885 = vld [vmem:[#allocation2 + $0x174] sm:$0xff]
    %v1886 = vld [vmem:[#allocation2 + $0x17c] sm:$0xff]
    %v1887 = vld [vmem:[#allocation2 + $0x188] sm:$0xff]
    %v1888 = vld [vmem:[#allocation2 + $0x190] sm:$0xff]
    %v1889 = vld [vmem:[#allocation2 + $0x198] sm:$0xff]
    %v1890 = vld [vmem:[#allocation2 + $0x1a4] sm:$0xff]
    %v1891 = vld [vmem:[#allocation2 + $0x1ac] sm:$0xff]
    %v1892 = vld [vmem:[#allocation2 + $0x1b4] sm:$0xff]
    %v1893 = vld [vmem:[#allocation2 + $0x1c0] sm:$0xff]
    %v1894 = vld [vmem:[#allocation2 + $0x1c8] sm:$0xff]
    %v1895 = vld [vmem:[#allocation2 + $0x1d0] sm:$0xff]
    %v1896 = vld [vmem:[#allocation2 + $0x1dc] sm:$0xff]
    %v1897 = vld [vmem:[#allocation2 + $0x1e4] sm:$0xff]
    %v1898 = vld [vmem:[#allocation2 + $0x1ec] sm:$0xff]
    %v1899 = vld [vmem:[%s4] sm:$0xff]
    %v1900 = vld [vmem:[%s4 + $0x8] sm:$0xff]
    %1902 = vset.pattern.permute.xlu0 0
    %1903 = vperm.xlu0 %1902, %v1899
    %v1904 = vpop.permute.xlu0 %1903
    %1907 = vset.pattern.permute.xlu0 0
    %1908 = vperm.xlu0 %1907, %v1900
    %v1909 = vpop.permute.xlu0 %1908
    %v1913 = vunpack.c.l.b16 %v1843
    %v1914 = vunpack.c.h.b16 %v1843
    %v1915 = vunpack.c.l.b16 %v1844
    %v1916 = vunpack.c.h.b16 %v1844
    %v1917 = vpack.c.b16 %v1915, %v1913
    %v1918 = vpack.c.b16 %v1916, %v1914
    %v1974 = vunpack.c.l.b16 %v1845
    %v1975 = vunpack.c.h.b16 %v1845
    %v1976 = vunpack.c.l.b16 %v1846
    %v1977 = vunpack.c.h.b16 %v1846
    %v1978 = vunpack.c.l.b16 %v1847
    %v1979 = vunpack.c.h.b16 %v1847
    %v1980 = vunpack.c.l.b16 %v1848
    %v1981 = vunpack.c.h.b16 %v1848
    %v1982 = vunpack.c.l.b16 %v1849
    %v1983 = vunpack.c.h.b16 %v1849
    %v1984 = vunpack.c.l.b16 %v1850
    %v1985 = vunpack.c.h.b16 %v1850
    %v1986 = vunpack.c.l.b16 %v1851
    %v1987 = vunpack.c.h.b16 %v1851
    %v1988 = vunpack.c.l.b16 %v1852
    %v1989 = vunpack.c.h.b16 %v1852
    %v1990 = vunpack.c.l.b16 %v1853
    %v1991 = vunpack.c.h.b16 %v1853
    %v1992 = vunpack.c.l.b16 %v1854
    %v1993 = vunpack.c.h.b16 %v1854
    %v1994 = vunpack.c.l.b16 %v1855
    %v1995 = vunpack.c.h.b16 %v1855
    %v1996 = vunpack.c.l.b16 %v1856
    %v1997 = vunpack.c.h.b16 %v1856
    %v1998 = vunpack.c.l.b16 %v1857
    %v1999 = vunpack.c.h.b16 %v1857
    %v2000 = vunpack.c.l.b16 %v1858
    %v2001 = vunpack.c.h.b16 %v1858
    %v2002 = vunpack.c.l.b16 %v1859
    %v2003 = vunpack.c.h.b16 %v1859
    %v2004 = vunpack.c.l.b16 %v1860
    %v2005 = vunpack.c.h.b16 %v1860
    %v2006 = vunpack.c.l.b16 %v1861
    %v2007 = vunpack.c.h.b16 %v1861
    %v2008 = vunpack.c.l.b16 %v1862
    %v2009 = vunpack.c.h.b16 %v1862
    %v2010 = vunpack.c.l.b16 %v1863
    %v2011 = vunpack.c.h.b16 %v1863
    %v2012 = vunpack.c.l.b16 %v1864
    %v2013 = vunpack.c.h.b16 %v1864
    %v2014 = vunpack.c.l.b16 %v1865
    %v2015 = vunpack.c.h.b16 %v1865
    %v2016 = vunpack.c.l.b16 %v1866
    %v2017 = vunpack.c.h.b16 %v1866
    %v2018 = vunpack.c.l.b16 %v1867
    %v2019 = vunpack.c.h.b16 %v1867
    %v2020 = vunpack.c.l.b16 %v1868
    %v2021 = vunpack.c.h.b16 %v1868
    %v2022 = vunpack.c.l.b16 %v1869
    %v2023 = vunpack.c.h.b16 %v1869
    %v2024 = vunpack.c.l.b16 %v1870
    %v2025 = vunpack.c.h.b16 %v1870
    %v2026 = vunpack.c.l.b16 %v1871
    %v2027 = vunpack.c.h.b16 %v1871
    %v2028 = vunpack.c.l.b16 %v1872
    %v2029 = vunpack.c.h.b16 %v1872
    %v2030 = vunpack.c.l.b16 %v1873
    %v2031 = vunpack.c.h.b16 %v1873
    %v2032 = vunpack.c.l.b16 %v1874
    %v2033 = vunpack.c.h.b16 %v1874
    %v2034 = vunpack.c.l.b16 %v1875
    %v2035 = vunpack.c.h.b16 %v1875
    %v2036 = vunpack.c.l.b16 %v1876
    %v2037 = vunpack.c.h.b16 %v1876
    %v2038 = vunpack.c.l.b16 %v1877
    %v2039 = vunpack.c.h.b16 %v1877
    %v2040 = vunpack.c.l.b16 %v1878
    %v2041 = vunpack.c.h.b16 %v1878
    %v2042 = vunpack.c.l.b16 %v1879
    %v2043 = vunpack.c.h.b16 %v1879
    %v2044 = vunpack.c.l.b16 %v1880
    %v2045 = vunpack.c.h.b16 %v1880
    %v2046 = vunpack.c.l.b16 %v1881
    %v2047 = vunpack.c.h.b16 %v1881
    %v2048 = vunpack.c.l.b16 %v1882
    %v2049 = vunpack.c.h.b16 %v1882
    %v2050 = vunpack.c.l.b16 %v1883
    %v2051 = vunpack.c.h.b16 %v1883
    %v2052 = vunpack.c.l.b16 %v1884
    %v2053 = vunpack.c.h.b16 %v1884
    %v2054 = vunpack.c.l.b16 %v1885
    %v2055 = vunpack.c.h.b16 %v1885
    %v2056 = vunpack.c.l.b16 %v1886
    %v2057 = vunpack.c.h.b16 %v1886
    %v2058 = vunpack.c.l.b16 %v1887
    %v2059 = vunpack.c.h.b16 %v1887
    %v2060 = vunpack.c.l.b16 %v1888
    %v2061 = vunpack.c.h.b16 %v1888
    %v2062 = vunpack.c.l.b16 %v1889
    %v2063 = vunpack.c.h.b16 %v1889
    %v2064 = vunpack.c.l.b16 %v1890
    %v2065 = vunpack.c.h.b16 %v1890
    %v2066 = vunpack.c.l.b16 %v1891
    %v2067 = vunpack.c.h.b16 %v1891
    %v2068 = vunpack.c.l.b16 %v1892
    %v2069 = vunpack.c.h.b16 %v1892
    %v2070 = vunpack.c.l.b16 %v1893
    %v2071 = vunpack.c.h.b16 %v1893
    %v2072 = vunpack.c.l.b16 %v1894
    %v2073 = vunpack.c.h.b16 %v1894
    %v2074 = vunpack.c.l.b16 %v1895
    %v2075 = vunpack.c.h.b16 %v1895
    %v2076 = vunpack.c.l.b16 %v1896
    %v2077 = vunpack.c.h.b16 %v1896
    %v2078 = vunpack.c.l.b16 %v1897
    %v2079 = vunpack.c.h.b16 %v1897
    %v2080 = vunpack.c.l.b16 %v1898
    %v2081 = vunpack.c.h.b16 %v1898
    %v2082 = vpack.c.b16 %v1980, %v1974
    %v2083 = vpack.c.b16 %v1981, %v1975
    %v2084 = vpack.c.b16 %v1982, %v1976
    %v2085 = vpack.c.b16 %v1983, %v1977
    %v2086 = vpack.c.b16 %v1984, %v1978
    %v2087 = vpack.c.b16 %v1985, %v1979
    %v2088 = vpack.c.b16 %v1992, %v1986
    %v2089 = vpack.c.b16 %v1993, %v1987
    %v2090 = vpack.c.b16 %v1994, %v1988
    %v2091 = vpack.c.b16 %v1995, %v1989
    %v2092 = vpack.c.b16 %v1996, %v1990
    %v2093 = vpack.c.b16 %v1997, %v1991
    %v2094 = vpack.c.b16 %v2004, %v1998
    %v2095 = vpack.c.b16 %v2005, %v1999
    %v2096 = vpack.c.b16 %v2006, %v2000
    %v2097 = vpack.c.b16 %v2007, %v2001
    %v2098 = vpack.c.b16 %v2008, %v2002
    %v2099 = vpack.c.b16 %v2009, %v2003
    %v2100 = vpack.c.b16 %v2016, %v2010
    %v2101 = vpack.c.b16 %v2017, %v2011
    %v2102 = vpack.c.b16 %v2018, %v2012
    %v2103 = vpack.c.b16 %v2019, %v2013
    %v2104 = vpack.c.b16 %v2020, %v2014
    %v2105 = vpack.c.b16 %v2021, %v2015
    %v2106 = vpack.c.b16 %v2028, %v2022
    %v2107 = vpack.c.b16 %v2029, %v2023
    %v2108 = vpack.c.b16 %v2030, %v2024
    %v2109 = vpack.c.b16 %v2031, %v2025
    %v2110 = vpack.c.b16 %v2032, %v2026
    %v2111 = vpack.c.b16 %v2033, %v2027
    %v2112 = vpack.c.b16 %v2040, %v2034
    %v2113 = vpack.c.b16 %v2041, %v2035
    %v2114 = vpack.c.b16 %v2042, %v2036
    %v2115 = vpack.c.b16 %v2043, %v2037
    %v2116 = vpack.c.b16 %v2044, %v2038
    %v2117 = vpack.c.b16 %v2045, %v2039
    %v2118 = vpack.c.b16 %v2052, %v2046
    %v2119 = vpack.c.b16 %v2053, %v2047
    %v2120 = vpack.c.b16 %v2054, %v2048
    %v2121 = vpack.c.b16 %v2055, %v2049
    %v2122 = vpack.c.b16 %v2056, %v2050
    %v2123 = vpack.c.b16 %v2057, %v2051
    %v2124 = vpack.c.b16 %v2064, %v2058
    %v2125 = vpack.c.b16 %v2065, %v2059
    %v2126 = vpack.c.b16 %v2066, %v2060
    %v2127 = vpack.c.b16 %v2067, %v2061
    %v2128 = vpack.c.b16 %v2068, %v2062
    %v2129 = vpack.c.b16 %v2069, %v2063
    %v2130 = vpack.c.b16 %v2076, %v2070
    %v2131 = vpack.c.b16 %v2077, %v2071
    %v2132 = vpack.c.b16 %v2078, %v2072
    %v2133 = vpack.c.b16 %v2079, %v2073
    %v2134 = vpack.c.b16 %v2080, %v2074
    %v2135 = vpack.c.b16 %v2081, %v2075
    %v2191 = vsel %vm1059, %v1918, 0
    %2193 = vmatpush.bf16.msra.mxu0 %v2124
    %2194 = vmatpush.bf16.msra.mxu0 %v2118
    %2195 = vmatpush.bf16.msra.mxu0 %v2112
    %2196 = vmatpush.bf16.msra.mxu0 %v2106
    %2197 = vmatpush.bf16.msra.mxu0 %v2100
    %2198 = vmatpush.bf16.msra.mxu0 %v2094
    %2199 = vmatpush.bf16.msra.mxu0 %v2088
    %2200 = vmatpush.bf16.msra.mxu0 %v2082
    %2201 = vmatmul.bf16.gmra.mxu0 %v1917
    %v2202 = vpop.f32.mrf.mxu0
    %v2203 = vadd.f32 %v1904, %v2202
    %v2204 = vpop.f32.mrf.mxu0
    %v2205 = vadd.f32 %v1909, %v2204
    %2206 = vdwg.mxu0
    %2207 = vmatpush.bf16.msra.mxu0 0
    %2208 = vmatpush.bf16.msra.mxu0 0
    %2209 = vmatpush.bf16.msra.mxu0 0
    %2210 = vmatpush.bf16.msra.mxu0 0
    %2211 = vmatpush.bf16.msra.mxu0 0
    %2212 = vmatpush.bf16.msra.mxu0 0
    %2213 = vmatpush.bf16.msra.mxu0 0
    %2214 = vmatpush.bf16.msra.mxu0 %v2130
    %2215 = vmatmul.bf16.gmra.mxu0 %v2191
    %v2216 = vpop.f32.mrf.mxu0
    %v2217 = vadd.f32 %v2203, %v2216
    %v2218 = vpop.f32.mrf.mxu0
    %v2219 = vadd.f32 %v2205, %v2218
    %2220 = vdwg.mxu0
    %2221 = vmatpush.bf16.msra.mxu0 %v2125
    %2222 = vmatpush.bf16.msra.mxu0 %v2119
    %2223 = vmatpush.bf16.msra.mxu0 %v2113
    %2224 = vmatpush.bf16.msra.mxu0 %v2107
    %2225 = vmatpush.bf16.msra.mxu0 %v2101
    %2226 = vmatpush.bf16.msra.mxu0 %v2095
    %2227 = vmatpush.bf16.msra.mxu0 %v2089
    %2228 = vmatpush.bf16.msra.mxu0 %v2083
    %2229 = vmatmul.bf16.gmra.mxu0 %v1917
    %v2230 = vpop.f32.mrf.mxu0
    %v2231 = vadd.f32 %v1904, %v2230
    %v2232 = vpop.f32.mrf.mxu0
    %v2233 = vadd.f32 %v1909, %v2232
    %2234 = vdwg.mxu0
    %2235 = vmatpush.bf16.msra.mxu0 0
    %2236 = vmatpush.bf16.msra.mxu0 0
    %2237 = vmatpush.bf16.msra.mxu0 0
    %2238 = vmatpush.bf16.msra.mxu0 0
    %2239 = vmatpush.bf16.msra.mxu0 0
    %2240 = vmatpush.bf16.msra.mxu0 0
    %2241 = vmatpush.bf16.msra.mxu0 0
    %2242 = vmatpush.bf16.msra.mxu0 %v2131
    %2243 = vmatmul.bf16.gmra.mxu0 %v2191
    %v2244 = vpop.f32.mrf.mxu0
    %v2245 = vadd.f32 %v2231, %v2244
    %v2246 = vpop.f32.mrf.mxu0
    %v2247 = vadd.f32 %v2233, %v2246
    %2248 = vdwg.mxu0
    %2249 = vmatpush.bf16.msra.mxu0 %v2126
    %2250 = vmatpush.bf16.msra.mxu0 %v2120
    %2251 = vmatpush.bf16.msra.mxu0 %v2114
    %2252 = vmatpush.bf16.msra.mxu0 %v2108
    %2253 = vmatpush.bf16.msra.mxu0 %v2102
    %2254 = vmatpush.bf16.msra.mxu0 %v2096
    %2255 = vmatpush.bf16.msra.mxu0 %v2090
    %2256 = vmatpush.bf16.msra.mxu0 %v2084
    %2257 = vmatmul.bf16.gmra.mxu0 %v1917
    %v2258 = vpop.f32.mrf.mxu0
    %v2259 = vadd.f32 %v1904, %v2258
    %v2260 = vpop.f32.mrf.mxu0
    %v2261 = vadd.f32 %v1909, %v2260
    %2262 = vdwg.mxu0
    %2263 = vmatpush.bf16.msra.mxu0 0
    %2264 = vmatpush.bf16.msra.mxu0 0
    %2265 = vmatpush.bf16.msra.mxu0 0
    %2266 = vmatpush.bf16.msra.mxu0 0
    %2267 = vmatpush.bf16.msra.mxu0 0
    %2268 = vmatpush.bf16.msra.mxu0 0
    %2269 = vmatpush.bf16.msra.mxu0 0
    %2270 = vmatpush.bf16.msra.mxu0 %v2132
    %2271 = vmatmul.bf16.gmra.mxu0 %v2191
    %v2272 = vpop.f32.mrf.mxu0
    %v2273 = vadd.f32 %v2259, %v2272
    %v2274 = vpop.f32.mrf.mxu0
    %v2275 = vadd.f32 %v2261, %v2274
    %2276 = vdwg.mxu0
    %2277 = vmatpush.bf16.msra.mxu0 %v2127
    %2278 = vmatpush.bf16.msra.mxu0 %v2121
    %2279 = vmatpush.bf16.msra.mxu0 %v2115
    %2280 = vmatpush.bf16.msra.mxu0 %v2109
    %2281 = vmatpush.bf16.msra.mxu0 %v2103
    %2282 = vmatpush.bf16.msra.mxu0 %v2097
    %2283 = vmatpush.bf16.msra.mxu0 %v2091
    %2284 = vmatpush.bf16.msra.mxu0 %v2085
    %2285 = vmatmul.bf16.gmra.mxu0 %v1917
    %v2286 = vpop.f32.mrf.mxu0
    %v2287 = vadd.f32 %v1904, %v2286
    %v2288 = vpop.f32.mrf.mxu0
    %v2289 = vadd.f32 %v1909, %v2288
    %2290 = vdwg.mxu0
    %2291 = vmatpush.bf16.msra.mxu0 0
    %2292 = vmatpush.bf16.msra.mxu0 0
    %2293 = vmatpush.bf16.msra.mxu0 0
    %2294 = vmatpush.bf16.msra.mxu0 0
    %2295 = vmatpush.bf16.msra.mxu0 0
    %2296 = vmatpush.bf16.msra.mxu0 0
    %2297 = vmatpush.bf16.msra.mxu0 0
    %2298 = vmatpush.bf16.msra.mxu0 %v2133
    %2299 = vmatmul.bf16.gmra.mxu0 %v2191
    %v2300 = vpop.f32.mrf.mxu0
    %v2301 = vadd.f32 %v2287, %v2300
    %v2302 = vpop.f32.mrf.mxu0
    %v2303 = vadd.f32 %v2289, %v2302
    %2304 = vdwg.mxu0
    %2305 = vmatpush.bf16.msra.mxu0 %v2128
    %2306 = vmatpush.bf16.msra.mxu0 %v2122
    %2307 = vmatpush.bf16.msra.mxu0 %v2116
    %2308 = vmatpush.bf16.msra.mxu0 %v2110
    %2309 = vmatpush.bf16.msra.mxu0 %v2104
    %2310 = vmatpush.bf16.msra.mxu0 %v2098
    %2311 = vmatpush.bf16.msra.mxu0 %v2092
    %2312 = vmatpush.bf16.msra.mxu0 %v2086
    %2313 = vmatmul.bf16.gmra.mxu0 %v1917
    %v2314 = vpop.f32.mrf.mxu0
    %v2315 = vadd.f32 %v1904, %v2314
    %v2316 = vpop.f32.mrf.mxu0
    %v2317 = vadd.f32 %v1909, %v2316
    %2318 = vdwg.mxu0
    %2319 = vmatpush.bf16.msra.mxu0 0
    %2320 = vmatpush.bf16.msra.mxu0 0
    %2321 = vmatpush.bf16.msra.mxu0 0
    %2322 = vmatpush.bf16.msra.mxu0 0
    %2323 = vmatpush.bf16.msra.mxu0 0
    %2324 = vmatpush.bf16.msra.mxu0 0
    %2325 = vmatpush.bf16.msra.mxu0 0
    %2326 = vmatpush.bf16.msra.mxu0 %v2134
    %2327 = vmatmul.bf16.gmra.mxu0 %v2191
    %v2328 = vpop.f32.mrf.mxu0
    %v2329 = vadd.f32 %v2315, %v2328
    %v2330 = vpop.f32.mrf.mxu0
    %v2331 = vadd.f32 %v2317, %v2330
    %2332 = vdwg.mxu0
    %2333 = vmatpush.bf16.msra.mxu0 %v2129
    %2334 = vmatpush.bf16.msra.mxu0 %v2123
    %2335 = vmatpush.bf16.msra.mxu0 %v2117
    %2336 = vmatpush.bf16.msra.mxu0 %v2111
    %2337 = vmatpush.bf16.msra.mxu0 %v2105
    %2338 = vmatpush.bf16.msra.mxu0 %v2099
    %2339 = vmatpush.bf16.msra.mxu0 %v2093
    %2340 = vmatpush.bf16.msra.mxu0 %v2087
    %2341 = vmatmul.bf16.gmra.mxu0 %v1917
    %v2342 = vpop.f32.mrf.mxu0
    %v2343 = vadd.f32 %v1904, %v2342
    %v2344 = vpop.f32.mrf.mxu0
    %v2345 = vadd.f32 %v1909, %v2344
    %2346 = vdwg.mxu0
    %2347 = vmatpush.bf16.msra.mxu0 0
    %2348 = vmatpush.bf16.msra.mxu0 0
    %2349 = vmatpush.bf16.msra.mxu0 0
    %2350 = vmatpush.bf16.msra.mxu0 0
    %2351 = vmatpush.bf16.msra.mxu0 0
    %2352 = vmatpush.bf16.msra.mxu0 0
    %2353 = vmatpush.bf16.msra.mxu0 0
    %2354 = vmatpush.bf16.msra.mxu0 %v2135
    %2355 = vmatmul.bf16.gmra.mxu0 %v2191
    %v2356 = vpop.f32.mrf.mxu0
    %v2357 = vadd.f32 %v2343, %v2356
    %v2358 = vpop.f32.mrf.mxu0
    %v2359 = vadd.f32 %v2345, %v2358
    %2360 = vdwg.mxu0
    %v2361 = vmax.f32 %v2217, 0.0
    %v2362 = vmax.f32 %v2245, 0.0
    %v2363 = vmax.f32 %v2273, 0.0
    %v2364 = vmax.f32 %v2301, 0.0
    %v2365 = vmax.f32 %v2329, 0.0
    %v2366 = vmax.f32 %v2357, 0.0
    %v2367 = vmax.f32 %v2219, 0.0
    %v2368 = vmax.f32 %v2247, 0.0
    %v2369 = vmax.f32 %v2275, 0.0
    %v2370 = vmax.f32 %v2303, 0.0
    %v2371 = vmax.f32 %v2331, 0.0
    %v2372 = vmax.f32 %v2359, 0.0
    %2373 = vst [vmem:[#allocation9] sm:$0xff] %v2361
    %2374 = vst [vmem:[#allocation9 + $0x8] sm:$0xff] %v2362
    %2375 = vst [vmem:[#allocation9 + $0x10] sm:$0xff] %v2363
    %2376 = vst [vmem:[#allocation9 + $0x18] sm:$0xff] %v2364
    %2377 = vst [vmem:[#allocation9 + $0x20] sm:$0xff] %v2365
    %2378 = vst [vmem:[#allocation9 + $0x28] sm:$0xff] %v2366
    %2379 = vst [vmem:[#allocation9 + $0x30] sm:$0xff] %v2367
    %2380 = vst [vmem:[#allocation9 + $0x38] sm:$0xff] %v2368
    %2381 = vst [vmem:[#allocation9 + $0x40] sm:$0xff] %v2369
    %2382 = vst [vmem:[#allocation9 + $0x48] sm:$0xff] %v2370
    %2383 = vst [vmem:[#allocation9 + $0x50] sm:$0xff] %v2371
    %2384 = vst [vmem:[#allocation9 + $0x58] sm:$0xff] %v2372
    // Predicated region
    $region34: #{tpu_custom_call.1} parent=1 // pred_check
      _
    $region35: #{tpu_custom_call.1} parent=1 // pred_check_branch
      %2386 = sbr.rel (0) target = $region37
    $region36: #{tpu_custom_call.1} parent=1 // pred_region
      %2388 = vsyncadd [#allocation6], 0
      %s2389 = sshll.u32 [#allocation9], 4
      %s2390 = int_to_ptr.vmem [resolvable:$true] %s2389
      %s2391 = sshll.u32 %s6, 4
      %s2392 = int_to_ptr.hbm [resolvable:$true] %s2391
      %2397 = dma.vmem_to_hbm [thread:$0]  %s2390, 1536, %s2392, [#allocation6], 768, 768, 48
    $region37: #{tpu_custom_call.1} parent=1 // pred_fallthru
      _
    // Predicated region
    $region38: #{tpu_custom_call.1} parent=1 // pred_check
      _
    $region39: #{tpu_custom_call.1} parent=1 // pred_check_branch
      %2399 = sbr.rel (0) target = $region41
    $region40: #{tpu_custom_call.1} parent=1 // pred_region
      %2401 = dma.done [#allocation6], 1536
    $region41: #{tpu_custom_call.1} parent=1 // pred_fallthru
      _
    %2402 = vsyncpa [#allocation5], 1
    %2403 = vsyncpa [#allocation8], 1
    %2404 = vsyncpa [#allocation6], 1

</llo_original>
